<compile_context>
chip_gen: v5e
topology: v5e:2x2
jax: 0.10.0
libtpu: 0.0.40
codegen_flags: <defaults>
</compile_context>

<pallas_src>
import functools

import jax
import jax.numpy as jnp
from jax.experimental import pallas as pl
from jax.experimental.pallas import tpu as pltpu


# --------------------------------------------------------------------------
# Fused kernel: 2 residual blocks = 4 (conv3x3 + folded BN) + 2 ReLU-adds.
# Activations are (C, S) with S = H*W on lanes.  A 3x3/pad=1 conv is
#   out[o, s] = sum_{k,i} W[o, k*C+i] * x[i, (s + off_k) mod S] * mask_k[s]
# realized as 8 lane-rotations (pltpu.roll, XLU) + mask multiplies written
# into a persistent bf16 VMEM slab, then contracted by ONE MXU matmul of
# shape (C, 9C) x (9C, S) with f32 accumulation.  mask_k zeroes taps that
# fall outside the image, so the modular wrap of the roll never contributes.
# --------------------------------------------------------------------------
def _ln_encoder_kernel(x_ref, masks_ref, w_ref, b_ref, out_ref, col_ref, *,
                       shifts):
    C = x_ref.shape[1]
    x = x_ref[0]                                        # (C, S) f32

    def conv3x3(h, idx):
        # Build the (9C, S) bf16 im2col slab in the reused VMEM scratch.
        for k in range(9):
            if shifts[k] == 0:
                tap = h                                  # center tap: mask == 1
            else:
                tap = pltpu.roll(h, shifts[k], axis=1) * masks_ref[k]
            col_ref[k * C:(k + 1) * C, :] = tap.astype(jnp.bfloat16)
        # Single bf16 MXU matmul per conv, f32 accumulation.
        y = jnp.dot(w_ref[idx], col_ref[...],
                    preferred_element_type=jnp.float32)
        return y + b_ref[idx]                            # folded-BN bias (C, 1)

    def basic_block(h, first):
        t = jnp.maximum(conv3x3(h, first), 0.0)          # conv1 + BN1 + ReLU
        t = conv3x3(t, first + 1)                        # conv2 + BN2
        return jnp.maximum(t + h, 0.0)                   # identity residual + ReLU

    h1 = basic_block(x, 0)                               # block1
    out_ref[0] = basic_block(h1, 2)                      # block2


# --------------------------------------------------------------------------
# Wrapper: NCHW in, NCHW out.  Spatial is flattened onto the lane axis (a pure
# reshape for NCHW); per-tap zero-pad masks (pre-broadcast to channels) and
# static lane-roll amounts are precomputed here.
# --------------------------------------------------------------------------
def ln_encoder(x_nchw, params):
    N, C, H, W = x_nchw.shape
    S = H * W
    x = x_nchw.reshape(N, C, S)

    h_idx = jnp.arange(S, dtype=jnp.int32) // W
    w_idx = jnp.arange(S, dtype=jnp.int32) % W
    masks, shifts = [], []
    for dh in (-1, 0, 1):
        for dw in (-1, 0, 1):
            valid = ((h_idx + dh >= 0) & (h_idx + dh < H) &
                     (w_idx + dw >= 0) & (w_idx + dw < W))
            masks.append(valid.astype(jnp.float32))
            shifts.append((-(dh * W + dw)) % S)          # lane s holds x[s+off]
    # Pre-broadcast to (9, C, S): the kernel never emits a sublane broadcast.
    masks = jnp.broadcast_to(jnp.stack(masks)[:, None, :], (9, C, S))
    shifts = tuple(shifts)

    kernel = functools.partial(_ln_encoder_kernel, shifts=shifts)
    out = pl.pallas_call(
        kernel,
        out_shape=jax.ShapeDtypeStruct((N, C, S), jnp.float32),
        grid=(N,),
        in_specs=[
            pl.BlockSpec((1, C, S), lambda b: (b, 0, 0)),        # x
            pl.BlockSpec((9, C, S), lambda b: (0, 0, 0)),        # tap masks (f32)
            pl.BlockSpec((4, C, 9 * C), lambda b: (0, 0, 0)),    # folded W (bf16)
            pl.BlockSpec((4, C, 1), lambda b: (0, 0, 0)),        # folded bias (f32)
        ],
        out_specs=pl.BlockSpec((1, C, S), lambda b: (b, 0, 0)),
        scratch_shapes=[pltpu.VMEM((9 * C, S), jnp.bfloat16)],   # im2col slab
        compiler_params=pltpu.CompilerParams(
            dimension_semantics=("parallel",)),
    )(x, masks, params["w"], params["b"])
    return out.reshape(N, C, H, W)


# --------------------------------------------------------------------------
# Deterministic parameters: 4 conv weights (OIHW) + inference-mode BN folded
# into (scale * W, bias).  Kernel layout: W[o, (kh*3+kw)*C + i], bf16 for MXU.
# --------------------------------------------------------------------------
def make_params(key, planes):
    C = planes
    ks = jax.random.split(key, 20)

    def conv_bn(i):
        w = 0.1 * jax.random.normal(ks[i], (C, C, 3, 3), jnp.float32)
        gamma = 1.0 + 0.1 * jax.random.normal(ks[i + 1], (C,), jnp.float32)
        beta = 0.1 * jax.random.normal(ks[i + 2], (C,), jnp.float32)
        mean = 0.1 * jax.random.normal(ks[i + 3], (C,), jnp.float32)
        var = jnp.abs(jax.random.normal(ks[i + 4], (C,), jnp.float32)) + 0.5
        scale = gamma / jnp.sqrt(var + 1e-5)
        return w * scale[:, None, None, None], beta - mean * scale

    folded = [conv_bn(5 * j) for j in range(4)]
    w_all = jnp.stack([jnp.transpose(wf, (0, 2, 3, 1)).reshape(C, 9 * C)
                       for wf, _ in folded]).astype(jnp.bfloat16)   # (4, C, 9C)
    b_all = jnp.stack([bf.reshape(C, 1) for _, bf in folded])       # (4, C, 1) f32
    return dict(w=w_all, b=b_all), folded


# --------------------------------------------------------------------------
# Pure-JAX reference (NCHW, full f32), mirrors the PyTorch forward with folded BN.
# --------------------------------------------------------------------------
def reference(x, folded):
    def conv(z, w, b):
        y = jax.lax.conv_general_dilated(
            z, w, window_strides=(1, 1), padding=[(1, 1), (1, 1)],
            dimension_numbers=("NCHW", "OIHW", "NCHW"),
            precision=jax.lax.Precision.HIGHEST)
        return y + b[None, :, None, None]

    def block(z, c1, c2):
        t = jnp.maximum(conv(z, *c1), 0.0)
        t = conv(t, *c2)
        return jnp.maximum(t + z, 0.0)

    h = block(x, folded[0], folded[1])
    return block(h, folded[2], folded[3])


if __name__ == "__main__":
    key = jax.random.PRNGKey(0)
    kx, kp = jax.random.split(key)

    N, C, H, W = 2, 16, 16, 16          # in_planes == out_planes (see header)
    x = jax.random.normal(kx, (N, C, H, W), jnp.float32)
    params, folded = make_params(kp, C)

    out = jax.jit(lambda v: ln_encoder(v, params))(x)
    out = jax.block_until_ready(out)

    ref = reference(x, folded)
    assert out.shape == (N, C, H, W) and out.dtype == jnp.float32
    max_err = float(jnp.max(jnp.abs(out - ref)))
    # bf16 MXU operands, f32 accumulation: tolerance sized for bf16 rounding.
    assert jnp.allclose(out, ref, atol=3e-2, rtol=2e-2), max_err

    print("KERNEL_OK")
</pallas_src>

<mosaic_0001>
module attributes {stable_mosaic.version = 11 : i64} {
  func.func @_ln_encoder_kernel(%arg0: i32, %arg1: memref<1x16x256xf32, #tpu.memory_space<vmem>>, %arg2: memref<9x16x256xf32, #tpu.memory_space<vmem>>, %arg3: memref<4x16x144xbf16, #tpu.memory_space<vmem>>, %arg4: memref<4x16x1xf32, #tpu.memory_space<vmem>>, %arg5: memref<1x16x256xf32, #tpu.memory_space<vmem>>, %arg6: memref<144x256xbf16, #tpu.memory_space<vmem>>) attributes {dimension_semantics = [#tpu.dimension_semantics<parallel>], iteration_bounds = array<i64: 2>, scalar_prefetch = 0 : i64, scratch_operands = 1 : i64, tpu.core_type = #tpu.core_type<tc>, window_params = [{transform_indices = @transform_0, window_bounds = array<i64: 1, 16, 256>}, {pipeline_mode = #tpu.pipeline_mode<synchronous>, transform_indices = @transform_1, window_bounds = array<i64: 9, 16, 256>}, {pipeline_mode = #tpu.pipeline_mode<synchronous>, transform_indices = @transform_2, window_bounds = array<i64: 4, 16, 144>}, {pipeline_mode = #tpu.pipeline_mode<synchronous>, transform_indices = @transform_3, window_bounds = array<i64: 4, 16, 1>}, {transform_indices = @transform_4, window_bounds = array<i64: 1, 16, 256>}]} {
    %c0 = arith.constant 0 : index
    %c0_0 = arith.constant 0 : index
    %c0_1 = arith.constant 0 : index
    %0 = vector.load %arg1[%c0, %c0_0, %c0_1] : memref<1x16x256xf32, #tpu.memory_space<vmem>>, vector<1x16x256xf32>
    %1 = vector.shape_cast %0 : vector<1x16x256xf32> to vector<16x256xf32>
    %c17_i32 = arith.constant 17 : i32
    %2 = tpu.dynamic_rotate %1 by %c17_i32 dim 1 : vector<16x256xf32>, i32 -> vector<16x256xf32>
    %c0_2 = arith.constant 0 : index
    %c0_3 = arith.constant 0 : index
    %c0_4 = arith.constant 0 : index
    %3 = vector.load %arg2[%c0_2, %c0_3, %c0_4] : memref<9x16x256xf32, #tpu.memory_space<vmem>>, vector<1x16x256xf32>
    %4 = vector.shape_cast %3 : vector<1x16x256xf32> to vector<16x256xf32>
    %5 = arith.mulf %2, %4 : vector<16x256xf32>
    %6 = arith.truncf %5 : vector<16x256xf32> to vector<16x256xbf16>
    %c0_5 = arith.constant 0 : index
    %c0_6 = arith.constant 0 : index
    %7 = vector.load %arg6[%c0_5, %c0_6] : memref<144x256xbf16, #tpu.memory_space<vmem>>, vector<16x256xbf16>
    tpu.vector_store %arg6[%c0_5, %c0_6], %6 {strides = array<i32>} : memref<144x256xbf16, #tpu.memory_space<vmem>>, vector<16x256xbf16>,
    %c16_i32 = arith.constant 16 : i32
    %8 = tpu.dynamic_rotate %1 by %c16_i32 dim 1 : vector<16x256xf32>, i32 -> vector<16x256xf32>
    %c1 = arith.constant 1 : index
    %c0_7 = arith.constant 0 : index
    %c0_8 = arith.constant 0 : index
    %9 = vector.load %arg2[%c1, %c0_7, %c0_8] : memref<9x16x256xf32, #tpu.memory_space<vmem>>, vector<1x16x256xf32>
    %10 = vector.shape_cast %9 : vector<1x16x256xf32> to vector<16x256xf32>
    %11 = arith.mulf %8, %10 : vector<16x256xf32>
    %12 = arith.truncf %11 : vector<16x256xf32> to vector<16x256xbf16>
    %c16 = arith.constant 16 : index
    %c0_9 = arith.constant 0 : index
    %13 = vector.load %arg6[%c16, %c0_9] : memref<144x256xbf16, #tpu.memory_space<vmem>>, vector<16x256xbf16>
    tpu.vector_store %arg6[%c16, %c0_9], %12 {strides = array<i32>} : memref<144x256xbf16, #tpu.memory_space<vmem>>, vector<16x256xbf16>,
    %c15_i32 = arith.constant 15 : i32
    %14 = tpu.dynamic_rotate %1 by %c15_i32 dim 1 : vector<16x256xf32>, i32 -> vector<16x256xf32>
    %c2 = arith.constant 2 : index
    %c0_10 = arith.constant 0 : index
    %c0_11 = arith.constant 0 : index
    %15 = vector.load %arg2[%c2, %c0_10, %c0_11] : memref<9x16x256xf32, #tpu.memory_space<vmem>>, vector<1x16x256xf32>
    %16 = vector.shape_cast %15 : vector<1x16x256xf32> to vector<16x256xf32>
    %17 = arith.mulf %14, %16 : vector<16x256xf32>
    %18 = arith.truncf %17 : vector<16x256xf32> to vector<16x256xbf16>
    %c32 = arith.constant 32 : index
    %c0_12 = arith.constant 0 : index
    %19 = vector.load %arg6[%c32, %c0_12] : memref<144x256xbf16, #tpu.memory_space<vmem>>, vector<16x256xbf16>
    tpu.vector_store %arg6[%c32, %c0_12], %18 {strides = array<i32>} : memref<144x256xbf16, #tpu.memory_space<vmem>>, vector<16x256xbf16>,
    %c1_i32 = arith.constant 1 : i32
    %20 = tpu.dynamic_rotate %1 by %c1_i32 dim 1 : vector<16x256xf32>, i32 -> vector<16x256xf32>
    %c3 = arith.constant 3 : index
    %c0_13 = arith.constant 0 : index
    %c0_14 = arith.constant 0 : index
    %21 = vector.load %arg2[%c3, %c0_13, %c0_14] : memref<9x16x256xf32, #tpu.memory_space<vmem>>, vector<1x16x256xf32>
    %22 = vector.shape_cast %21 : vector<1x16x256xf32> to vector<16x256xf32>
    %23 = arith.mulf %20, %22 : vector<16x256xf32>
    %24 = arith.truncf %23 : vector<16x256xf32> to vector<16x256xbf16>
    %c48 = arith.constant 48 : index
    %c0_15 = arith.constant 0 : index
    %25 = vector.load %arg6[%c48, %c0_15] : memref<144x256xbf16, #tpu.memory_space<vmem>>, vector<16x256xbf16>
    tpu.vector_store %arg6[%c48, %c0_15], %24 {strides = array<i32>} : memref<144x256xbf16, #tpu.memory_space<vmem>>, vector<16x256xbf16>,
    %26 = arith.truncf %1 : vector<16x256xf32> to vector<16x256xbf16>
    %c64 = arith.constant 64 : index
    %c0_16 = arith.constant 0 : index
    %27 = vector.load %arg6[%c64, %c0_16] : memref<144x256xbf16, #tpu.memory_space<vmem>>, vector<16x256xbf16>
    tpu.vector_store %arg6[%c64, %c0_16], %26 {strides = array<i32>} : memref<144x256xbf16, #tpu.memory_space<vmem>>, vector<16x256xbf16>,
    %c255_i32 = arith.constant 255 : i32
    %28 = tpu.dynamic_rotate %1 by %c255_i32 dim 1 : vector<16x256xf32>, i32 -> vector<16x256xf32>
    %c5 = arith.constant 5 : index
    %c0_17 = arith.constant 0 : index
    %c0_18 = arith.constant 0 : index
    %29 = vector.load %arg2[%c5, %c0_17, %c0_18] : memref<9x16x256xf32, #tpu.memory_space<vmem>>, vector<1x16x256xf32>
    %30 = vector.shape_cast %29 : vector<1x16x256xf32> to vector<16x256xf32>
    %31 = arith.mulf %28, %30 : vector<16x256xf32>
    %32 = arith.truncf %31 : vector<16x256xf32> to vector<16x256xbf16>
    %c80 = arith.constant 80 : index
    %c0_19 = arith.constant 0 : index
    %33 = vector.load %arg6[%c80, %c0_19] : memref<144x256xbf16, #tpu.memory_space<vmem>>, vector<16x256xbf16>
    tpu.vector_store %arg6[%c80, %c0_19], %32 {strides = array<i32>} : memref<144x256xbf16, #tpu.memory_space<vmem>>, vector<16x256xbf16>,
    %c241_i32 = arith.constant 241 : i32
    %34 = tpu.dynamic_rotate %1 by %c241_i32 dim 1 : vector<16x256xf32>, i32 -> vector<16x256xf32>
    %c6 = arith.constant 6 : index
    %c0_20 = arith.constant 0 : index
    %c0_21 = arith.constant 0 : index
    %35 = vector.load %arg2[%c6, %c0_20, %c0_21] : memref<9x16x256xf32, #tpu.memory_space<vmem>>, vector<1x16x256xf32>
    %36 = vector.shape_cast %35 : vector<1x16x256xf32> to vector<16x256xf32>
    %37 = arith.mulf %34, %36 : vector<16x256xf32>
    %38 = arith.truncf %37 : vector<16x256xf32> to vector<16x256xbf16>
    %c96 = arith.constant 96 : index
    %c0_22 = arith.constant 0 : index
    %39 = vector.load %arg6[%c96, %c0_22] : memref<144x256xbf16, #tpu.memory_space<vmem>>, vector<16x256xbf16>
    tpu.vector_store %arg6[%c96, %c0_22], %38 {strides = array<i32>} : memref<144x256xbf16, #tpu.memory_space<vmem>>, vector<16x256xbf16>,
    %c240_i32 = arith.constant 240 : i32
    %40 = tpu.dynamic_rotate %1 by %c240_i32 dim 1 : vector<16x256xf32>, i32 -> vector<16x256xf32>
    %c7 = arith.constant 7 : index
    %c0_23 = arith.constant 0 : index
    %c0_24 = arith.constant 0 : index
    %41 = vector.load %arg2[%c7, %c0_23, %c0_24] : memref<9x16x256xf32, #tpu.memory_space<vmem>>, vector<1x16x256xf32>
    %42 = vector.shape_cast %41 : vector<1x16x256xf32> to vector<16x256xf32>
    %43 = arith.mulf %40, %42 : vector<16x256xf32>
    %44 = arith.truncf %43 : vector<16x256xf32> to vector<16x256xbf16>
    %c112 = arith.constant 112 : index
    %c0_25 = arith.constant 0 : index
    %45 = vector.load %arg6[%c112, %c0_25] : memref<144x256xbf16, #tpu.memory_space<vmem>>, vector<16x256xbf16>
    tpu.vector_store %arg6[%c112, %c0_25], %44 {strides = array<i32>} : memref<144x256xbf16, #tpu.memory_space<vmem>>, vector<16x256xbf16>,
    %c239_i32 = arith.constant 239 : i32
    %46 = tpu.dynamic_rotate %1 by %c239_i32 dim 1 : vector<16x256xf32>, i32 -> vector<16x256xf32>
    %c8 = arith.constant 8 : index
    %c0_26 = arith.constant 0 : index
    %c0_27 = arith.constant 0 : index
    %47 = vector.load %arg2[%c8, %c0_26, %c0_27] : memref<9x16x256xf32, #tpu.memory_space<vmem>>, vector<1x16x256xf32>
    %48 = vector.shape_cast %47 : vector<1x16x256xf32> to vector<16x256xf32>
    %49 = arith.mulf %46, %48 : vector<16x256xf32>
    %50 = arith.truncf %49 : vector<16x256xf32> to vector<16x256xbf16>
    %c128 = arith.constant 128 : index
    %c0_28 = arith.constant 0 : index
    %51 = vector.load %arg6[%c128, %c0_28] : memref<144x256xbf16, #tpu.memory_space<vmem>>, vector<16x256xbf16>
    tpu.vector_store %arg6[%c128, %c0_28], %50 {strides = array<i32>} : memref<144x256xbf16, #tpu.memory_space<vmem>>, vector<16x256xbf16>,
    %c0_29 = arith.constant 0 : index
    %c0_30 = arith.constant 0 : index
    %c0_31 = arith.constant 0 : index
    %52 = vector.load %arg3[%c0_29, %c0_30, %c0_31] : memref<4x16x144xbf16, #tpu.memory_space<vmem>>, vector<1x16x144xbf16>
    %53 = vector.shape_cast %52 : vector<1x16x144xbf16> to vector<16x144xbf16>
    %c0_32 = arith.constant 0 : index
    %c0_33 = arith.constant 0 : index
    %54 = vector.load %arg6[%c0_32, %c0_33] : memref<144x256xbf16, #tpu.memory_space<vmem>>, vector<144x256xbf16>
    %cst = arith.constant dense<0.000000e+00> : vector<16x256xf32>
    %55 = tpu.matmul %53, %54, %cst {dimension_numbers = #tpu.dot_dimension_numbers<[1], [0], [0], [1], [0, 0, 1, 1], [], []>} : vector<16x144xbf16>, vector<144x256xbf16>, vector<16x256xf32> -> vector<16x256xf32>
    %c0_34 = arith.constant 0 : index
    %c0_35 = arith.constant 0 : index
    %c0_36 = arith.constant 0 : index
    %56 = vector.load %arg4[%c0_34, %c0_35, %c0_36] : memref<4x16x1xf32, #tpu.memory_space<vmem>>, vector<1x16x1xf32>
    %57 = vector.shape_cast %56 : vector<1x16x1xf32> to vector<16x1xf32>
    %58 = vector.broadcast %57 : vector<16x1xf32> to vector<16x256xf32>
    %59 = arith.addf %55, %58 : vector<16x256xf32>
    %cst_37 = arith.constant 0.000000e+00 : f32
    %60 = vector.broadcast %cst_37 : f32 to vector<16x256xf32>
    %61 = arith.maximumf %59, %60 : vector<16x256xf32>
    %c17_i32_38 = arith.constant 17 : i32
    %62 = tpu.dynamic_rotate %61 by %c17_i32_38 dim 1 : vector<16x256xf32>, i32 -> vector<16x256xf32>
    %c0_39 = arith.constant 0 : index
    %c0_40 = arith.constant 0 : index
    %c0_41 = arith.constant 0 : index
    %63 = vector.load %arg2[%c0_39, %c0_40, %c0_41] : memref<9x16x256xf32, #tpu.memory_space<vmem>>, vector<1x16x256xf32>
    %64 = vector.shape_cast %63 : vector<1x16x256xf32> to vector<16x256xf32>
    %65 = arith.mulf %62, %64 : vector<16x256xf32>
    %66 = arith.truncf %65 : vector<16x256xf32> to vector<16x256xbf16>
    %c0_42 = arith.constant 0 : index
    %c0_43 = arith.constant 0 : index
    %67 = vector.load %arg6[%c0_42, %c0_43] : memref<144x256xbf16, #tpu.memory_space<vmem>>, vector<16x256xbf16>
    tpu.vector_store %arg6[%c0_42, %c0_43], %66 {strides = array<i32>} : memref<144x256xbf16, #tpu.memory_space<vmem>>, vector<16x256xbf16>,
    %c16_i32_44 = arith.constant 16 : i32
    %68 = tpu.dynamic_rotate %61 by %c16_i32_44 dim 1 : vector<16x256xf32>, i32 -> vector<16x256xf32>
    %c1_45 = arith.constant 1 : index
    %c0_46 = arith.constant 0 : index
    %c0_47 = arith.constant 0 : index
    %69 = vector.load %arg2[%c1_45, %c0_46, %c0_47] : memref<9x16x256xf32, #tpu.memory_space<vmem>>, vector<1x16x256xf32>
    %70 = vector.shape_cast %69 : vector<1x16x256xf32> to vector<16x256xf32>
    %71 = arith.mulf %68, %70 : vector<16x256xf32>
    %72 = arith.truncf %71 : vector<16x256xf32> to vector<16x256xbf16>
    %c16_48 = arith.constant 16 : index
    %c0_49 = arith.constant 0 : index
    %73 = vector.load %arg6[%c16_48, %c0_49] : memref<144x256xbf16, #tpu.memory_space<vmem>>, vector<16x256xbf16>
    tpu.vector_store %arg6[%c16_48, %c0_49], %72 {strides = array<i32>} : memref<144x256xbf16, #tpu.memory_space<vmem>>, vector<16x256xbf16>,
    %c15_i32_50 = arith.constant 15 : i32
    %74 = tpu.dynamic_rotate %61 by %c15_i32_50 dim 1 : vector<16x256xf32>, i32 -> vector<16x256xf32>
    %c2_51 = arith.constant 2 : index
    %c0_52 = arith.constant 0 : index
    %c0_53 = arith.constant 0 : index
    %75 = vector.load %arg2[%c2_51, %c0_52, %c0_53] : memref<9x16x256xf32, #tpu.memory_space<vmem>>, vector<1x16x256xf32>
    %76 = vector.shape_cast %75 : vector<1x16x256xf32> to vector<16x256xf32>
    %77 = arith.mulf %74, %76 : vector<16x256xf32>
    %78 = arith.truncf %77 : vector<16x256xf32> to vector<16x256xbf16>
    %c32_54 = arith.constant 32 : index
    %c0_55 = arith.constant 0 : index
    %79 = vector.load %arg6[%c32_54, %c0_55] : memref<144x256xbf16, #tpu.memory_space<vmem>>, vector<16x256xbf16>
    tpu.vector_store %arg6[%c32_54, %c0_55], %78 {strides = array<i32>} : memref<144x256xbf16, #tpu.memory_space<vmem>>, vector<16x256xbf16>,
    %c1_i32_56 = arith.constant 1 : i32
    %80 = tpu.dynamic_rotate %61 by %c1_i32_56 dim 1 : vector<16x256xf32>, i32 -> vector<16x256xf32>
    %c3_57 = arith.constant 3 : index
    %c0_58 = arith.constant 0 : index
    %c0_59 = arith.constant 0 : index
    %81 = vector.load %arg2[%c3_57, %c0_58, %c0_59] : memref<9x16x256xf32, #tpu.memory_space<vmem>>, vector<1x16x256xf32>
    %82 = vector.shape_cast %81 : vector<1x16x256xf32> to vector<16x256xf32>
    %83 = arith.mulf %80, %82 : vector<16x256xf32>
    %84 = arith.truncf %83 : vector<16x256xf32> to vector<16x256xbf16>
    %c48_60 = arith.constant 48 : index
    %c0_61 = arith.constant 0 : index
    %85 = vector.load %arg6[%c48_60, %c0_61] : memref<144x256xbf16, #tpu.memory_space<vmem>>, vector<16x256xbf16>
    tpu.vector_store %arg6[%c48_60, %c0_61], %84 {strides = array<i32>} : memref<144x256xbf16, #tpu.memory_space<vmem>>, vector<16x256xbf16>,
    %86 = arith.truncf %61 : vector<16x256xf32> to vector<16x256xbf16>
    %c64_62 = arith.constant 64 : index
    %c0_63 = arith.constant 0 : index
    %87 = vector.load %arg6[%c64_62, %c0_63] : memref<144x256xbf16, #tpu.memory_space<vmem>>, vector<16x256xbf16>
    tpu.vector_store %arg6[%c64_62, %c0_63], %86 {strides = array<i32>} : memref<144x256xbf16, #tpu.memory_space<vmem>>, vector<16x256xbf16>,
    %c255_i32_64 = arith.constant 255 : i32
    %88 = tpu.dynamic_rotate %61 by %c255_i32_64 dim 1 : vector<16x256xf32>, i32 -> vector<16x256xf32>
    %c5_65 = arith.constant 5 : index
    %c0_66 = arith.constant 0 : index
    %c0_67 = arith.constant 0 : index
    %89 = vector.load %arg2[%c5_65, %c0_66, %c0_67] : memref<9x16x256xf32, #tpu.memory_space<vmem>>, vector<1x16x256xf32>
    %90 = vector.shape_cast %89 : vector<1x16x256xf32> to vector<16x256xf32>
    %91 = arith.mulf %88, %90 : vector<16x256xf32>
    %92 = arith.truncf %91 : vector<16x256xf32> to vector<16x256xbf16>
    %c80_68 = arith.constant 80 : index
    %c0_69 = arith.constant 0 : index
    %93 = vector.load %arg6[%c80_68, %c0_69] : memref<144x256xbf16, #tpu.memory_space<vmem>>, vector<16x256xbf16>
    tpu.vector_store %arg6[%c80_68, %c0_69], %92 {strides = array<i32>} : memref<144x256xbf16, #tpu.memory_space<vmem>>, vector<16x256xbf16>,
    %c241_i32_70 = arith.constant 241 : i32
    %94 = tpu.dynamic_rotate %61 by %c241_i32_70 dim 1 : vector<16x256xf32>, i32 -> vector<16x256xf32>
    %c6_71 = arith.constant 6 : index
    %c0_72 = arith.constant 0 : index
    %c0_73 = arith.constant 0 : index
    %95 = vector.load %arg2[%c6_71, %c0_72, %c0_73] : memref<9x16x256xf32, #tpu.memory_space<vmem>>, vector<1x16x256xf32>
    %96 = vector.shape_cast %95 : vector<1x16x256xf32> to vector<16x256xf32>
    %97 = arith.mulf %94, %96 : vector<16x256xf32>
    %98 = arith.truncf %97 : vector<16x256xf32> to vector<16x256xbf16>
    %c96_74 = arith.constant 96 : index
    %c0_75 = arith.constant 0 : index
    %99 = vector.load %arg6[%c96_74, %c0_75] : memref<144x256xbf16, #tpu.memory_space<vmem>>, vector<16x256xbf16>
    tpu.vector_store %arg6[%c96_74, %c0_75], %98 {strides = array<i32>} : memref<144x256xbf16, #tpu.memory_space<vmem>>, vector<16x256xbf16>,
    %c240_i32_76 = arith.constant 240 : i32
    %100 = tpu.dynamic_rotate %61 by %c240_i32_76 dim 1 : vector<16x256xf32>, i32 -> vector<16x256xf32>
    %c7_77 = arith.constant 7 : index
    %c0_78 = arith.constant 0 : index
    %c0_79 = arith.constant 0 : index
    %101 = vector.load %arg2[%c7_77, %c0_78, %c0_79] : memref<9x16x256xf32, #tpu.memory_space<vmem>>, vector<1x16x256xf32>
    %102 = vector.shape_cast %101 : vector<1x16x256xf32> to vector<16x256xf32>
    %103 = arith.mulf %100, %102 : vector<16x256xf32>
    %104 = arith.truncf %103 : vector<16x256xf32> to vector<16x256xbf16>
    %c112_80 = arith.constant 112 : index
    %c0_81 = arith.constant 0 : index
    %105 = vector.load %arg6[%c112_80, %c0_81] : memref<144x256xbf16, #tpu.memory_space<vmem>>, vector<16x256xbf16>
    tpu.vector_store %arg6[%c112_80, %c0_81], %104 {strides = array<i32>} : memref<144x256xbf16, #tpu.memory_space<vmem>>, vector<16x256xbf16>,
    %c239_i32_82 = arith.constant 239 : i32
    %106 = tpu.dynamic_rotate %61 by %c239_i32_82 dim 1 : vector<16x256xf32>, i32 -> vector<16x256xf32>
    %c8_83 = arith.constant 8 : index
    %c0_84 = arith.constant 0 : index
    %c0_85 = arith.constant 0 : index
    %107 = vector.load %arg2[%c8_83, %c0_84, %c0_85] : memref<9x16x256xf32, #tpu.memory_space<vmem>>, vector<1x16x256xf32>
    %108 = vector.shape_cast %107 : vector<1x16x256xf32> to vector<16x256xf32>
    %109 = arith.mulf %106, %108 : vector<16x256xf32>
    %110 = arith.truncf %109 : vector<16x256xf32> to vector<16x256xbf16>
    %c128_86 = arith.constant 128 : index
    %c0_87 = arith.constant 0 : index
    %111 = vector.load %arg6[%c128_86, %c0_87] : memref<144x256xbf16, #tpu.memory_space<vmem>>, vector<16x256xbf16>
    tpu.vector_store %arg6[%c128_86, %c0_87], %110 {strides = array<i32>} : memref<144x256xbf16, #tpu.memory_space<vmem>>, vector<16x256xbf16>,
    %c1_88 = arith.constant 1 : index
    %c0_89 = arith.constant 0 : index
    %c0_90 = arith.constant 0 : index
    %112 = vector.load %arg3[%c1_88, %c0_89, %c0_90] : memref<4x16x144xbf16, #tpu.memory_space<vmem>>, vector<1x16x144xbf16>
    %113 = vector.shape_cast %112 : vector<1x16x144xbf16> to vector<16x144xbf16>
    %c0_91 = arith.constant 0 : index
    %c0_92 = arith.constant 0 : index
    %114 = vector.load %arg6[%c0_91, %c0_92] : memref<144x256xbf16, #tpu.memory_space<vmem>>, vector<144x256xbf16>
    %cst_93 = arith.constant dense<0.000000e+00> : vector<16x256xf32>
    %115 = tpu.matmul %113, %114, %cst_93 {dimension_numbers = #tpu.dot_dimension_numbers<[1], [0], [0], [1], [0, 0, 1, 1], [], []>} : vector<16x144xbf16>, vector<144x256xbf16>, vector<16x256xf32> -> vector<16x256xf32>
    %c1_94 = arith.constant 1 : index
    %c0_95 = arith.constant 0 : index
    %c0_96 = arith.constant 0 : index
    %116 = vector.load %arg4[%c1_94, %c0_95, %c0_96] : memref<4x16x1xf32, #tpu.memory_space<vmem>>, vector<1x16x1xf32>
    %117 = vector.shape_cast %116 : vector<1x16x1xf32> to vector<16x1xf32>
    %118 = vector.broadcast %117 : vector<16x1xf32> to vector<16x256xf32>
    %119 = arith.addf %115, %118 : vector<16x256xf32>
    %120 = arith.addf %119, %1 : vector<16x256xf32>
    %cst_97 = arith.constant 0.000000e+00 : f32
    %121 = vector.broadcast %cst_97 : f32 to vector<16x256xf32>
    %122 = arith.maximumf %120, %121 : vector<16x256xf32>
    %c17_i32_98 = arith.constant 17 : i32
    %123 = tpu.dynamic_rotate %122 by %c17_i32_98 dim 1 : vector<16x256xf32>, i32 -> vector<16x256xf32>
    %c0_99 = arith.constant 0 : index
    %c0_100 = arith.constant 0 : index
    %c0_101 = arith.constant 0 : index
    %124 = vector.load %arg2[%c0_99, %c0_100, %c0_101] : memref<9x16x256xf32, #tpu.memory_space<vmem>>, vector<1x16x256xf32>
    %125 = vector.shape_cast %124 : vector<1x16x256xf32> to vector<16x256xf32>
    %126 = arith.mulf %123, %125 : vector<16x256xf32>
    %127 = arith.truncf %126 : vector<16x256xf32> to vector<16x256xbf16>
    %c0_102 = arith.constant 0 : index
    %c0_103 = arith.constant 0 : index
    %128 = vector.load %arg6[%c0_102, %c0_103] : memref<144x256xbf16, #tpu.memory_space<vmem>>, vector<16x256xbf16>
    tpu.vector_store %arg6[%c0_102, %c0_103], %127 {strides = array<i32>} : memref<144x256xbf16, #tpu.memory_space<vmem>>, vector<16x256xbf16>,
    %c16_i32_104 = arith.constant 16 : i32
    %129 = tpu.dynamic_rotate %122 by %c16_i32_104 dim 1 : vector<16x256xf32>, i32 -> vector<16x256xf32>
    %c1_105 = arith.constant 1 : index
    %c0_106 = arith.constant 0 : index
    %c0_107 = arith.constant 0 : index
    %130 = vector.load %arg2[%c1_105, %c0_106, %c0_107] : memref<9x16x256xf32, #tpu.memory_space<vmem>>, vector<1x16x256xf32>
    %131 = vector.shape_cast %130 : vector<1x16x256xf32> to vector<16x256xf32>
    %132 = arith.mulf %129, %131 : vector<16x256xf32>
    %133 = arith.truncf %132 : vector<16x256xf32> to vector<16x256xbf16>
    %c16_108 = arith.constant 16 : index
    %c0_109 = arith.constant 0 : index
    %134 = vector.load %arg6[%c16_108, %c0_109] : memref<144x256xbf16, #tpu.memory_space<vmem>>, vector<16x256xbf16>
    tpu.vector_store %arg6[%c16_108, %c0_109], %133 {strides = array<i32>} : memref<144x256xbf16, #tpu.memory_space<vmem>>, vector<16x256xbf16>,
    %c15_i32_110 = arith.constant 15 : i32
    %135 = tpu.dynamic_rotate %122 by %c15_i32_110 dim 1 : vector<16x256xf32>, i32 -> vector<16x256xf32>
    %c2_111 = arith.constant 2 : index
    %c0_112 = arith.constant 0 : index
    %c0_113 = arith.constant 0 : index
    %136 = vector.load %arg2[%c2_111, %c0_112, %c0_113] : memref<9x16x256xf32, #tpu.memory_space<vmem>>, vector<1x16x256xf32>
    %137 = vector.shape_cast %136 : vector<1x16x256xf32> to vector<16x256xf32>
    %138 = arith.mulf %135, %137 : vector<16x256xf32>
    %139 = arith.truncf %138 : vector<16x256xf32> to vector<16x256xbf16>
    %c32_114 = arith.constant 32 : index
    %c0_115 = arith.constant 0 : index
    %140 = vector.load %arg6[%c32_114, %c0_115] : memref<144x256xbf16, #tpu.memory_space<vmem>>, vector<16x256xbf16>
    tpu.vector_store %arg6[%c32_114, %c0_115], %139 {strides = array<i32>} : memref<144x256xbf16, #tpu.memory_space<vmem>>, vector<16x256xbf16>,
    %c1_i32_116 = arith.constant 1 : i32
    %141 = tpu.dynamic_rotate %122 by %c1_i32_116 dim 1 : vector<16x256xf32>, i32 -> vector<16x256xf32>
    %c3_117 = arith.constant 3 : index
    %c0_118 = arith.constant 0 : index
    %c0_119 = arith.constant 0 : index
    %142 = vector.load %arg2[%c3_117, %c0_118, %c0_119] : memref<9x16x256xf32, #tpu.memory_space<vmem>>, vector<1x16x256xf32>
    %143 = vector.shape_cast %142 : vector<1x16x256xf32> to vector<16x256xf32>
    %144 = arith.mulf %141, %143 : vector<16x256xf32>
    %145 = arith.truncf %144 : vector<16x256xf32> to vector<16x256xbf16>
    %c48_120 = arith.constant 48 : index
    %c0_121 = arith.constant 0 : index
    %146 = vector.load %arg6[%c48_120, %c0_121] : memref<144x256xbf16, #tpu.memory_space<vmem>>, vector<16x256xbf16>
    tpu.vector_store %arg6[%c48_120, %c0_121], %145 {strides = array<i32>} : memref<144x256xbf16, #tpu.memory_space<vmem>>, vector<16x256xbf16>,
    %147 = arith.truncf %122 : vector<16x256xf32> to vector<16x256xbf16>
    %c64_122 = arith.constant 64 : index
    %c0_123 = arith.constant 0 : index
    %148 = vector.load %arg6[%c64_122, %c0_123] : memref<144x256xbf16, #tpu.memory_space<vmem>>, vector<16x256xbf16>
    tpu.vector_store %arg6[%c64_122, %c0_123], %147 {strides = array<i32>} : memref<144x256xbf16, #tpu.memory_space<vmem>>, vector<16x256xbf16>,
    %c255_i32_124 = arith.constant 255 : i32
    %149 = tpu.dynamic_rotate %122 by %c255_i32_124 dim 1 : vector<16x256xf32>, i32 -> vector<16x256xf32>
    %c5_125 = arith.constant 5 : index
    %c0_126 = arith.constant 0 : index
    %c0_127 = arith.constant 0 : index
    %150 = vector.load %arg2[%c5_125, %c0_126, %c0_127] : memref<9x16x256xf32, #tpu.memory_space<vmem>>, vector<1x16x256xf32>
    %151 = vector.shape_cast %150 : vector<1x16x256xf32> to vector<16x256xf32>
    %152 = arith.mulf %149, %151 : vector<16x256xf32>
    %153 = arith.truncf %152 : vector<16x256xf32> to vector<16x256xbf16>
    %c80_128 = arith.constant 80 : index
    %c0_129 = arith.constant 0 : index
    %154 = vector.load %arg6[%c80_128, %c0_129] : memref<144x256xbf16, #tpu.memory_space<vmem>>, vector<16x256xbf16>
    tpu.vector_store %arg6[%c80_128, %c0_129], %153 {strides = array<i32>} : memref<144x256xbf16, #tpu.memory_space<vmem>>, vector<16x256xbf16>,
    %c241_i32_130 = arith.constant 241 : i32
    %155 = tpu.dynamic_rotate %122 by %c241_i32_130 dim 1 : vector<16x256xf32>, i32 -> vector<16x256xf32>
    %c6_131 = arith.constant 6 : index
    %c0_132 = arith.constant 0 : index
    %c0_133 = arith.constant 0 : index
    %156 = vector.load %arg2[%c6_131, %c0_132, %c0_133] : memref<9x16x256xf32, #tpu.memory_space<vmem>>, vector<1x16x256xf32>
    %157 = vector.shape_cast %156 : vector<1x16x256xf32> to vector<16x256xf32>
    %158 = arith.mulf %155, %157 : vector<16x256xf32>
    %159 = arith.truncf %158 : vector<16x256xf32> to vector<16x256xbf16>
    %c96_134 = arith.constant 96 : index
    %c0_135 = arith.constant 0 : index
    %160 = vector.load %arg6[%c96_134, %c0_135] : memref<144x256xbf16, #tpu.memory_space<vmem>>, vector<16x256xbf16>
    tpu.vector_store %arg6[%c96_134, %c0_135], %159 {strides = array<i32>} : memref<144x256xbf16, #tpu.memory_space<vmem>>, vector<16x256xbf16>,
    %c240_i32_136 = arith.constant 240 : i32
    %161 = tpu.dynamic_rotate %122 by %c240_i32_136 dim 1 : vector<16x256xf32>, i32 -> vector<16x256xf32>
    %c7_137 = arith.constant 7 : index
    %c0_138 = arith.constant 0 : index
    %c0_139 = arith.constant 0 : index
    %162 = vector.load %arg2[%c7_137, %c0_138, %c0_139] : memref<9x16x256xf32, #tpu.memory_space<vmem>>, vector<1x16x256xf32>
    %163 = vector.shape_cast %162 : vector<1x16x256xf32> to vector<16x256xf32>
    %164 = arith.mulf %161, %163 : vector<16x256xf32>
    %165 = arith.truncf %164 : vector<16x256xf32> to vector<16x256xbf16>
    %c112_140 = arith.constant 112 : index
    %c0_141 = arith.constant 0 : index
    %166 = vector.load %arg6[%c112_140, %c0_141] : memref<144x256xbf16, #tpu.memory_space<vmem>>, vector<16x256xbf16>
    tpu.vector_store %arg6[%c112_140, %c0_141], %165 {strides = array<i32>} : memref<144x256xbf16, #tpu.memory_space<vmem>>, vector<16x256xbf16>,
    %c239_i32_142 = arith.constant 239 : i32
    %167 = tpu.dynamic_rotate %122 by %c239_i32_142 dim 1 : vector<16x256xf32>, i32 -> vector<16x256xf32>
    %c8_143 = arith.constant 8 : index
    %c0_144 = arith.constant 0 : index
    %c0_145 = arith.constant 0 : index
    %168 = vector.load %arg2[%c8_143, %c0_144, %c0_145] : memref<9x16x256xf32, #tpu.memory_space<vmem>>, vector<1x16x256xf32>
    %169 = vector.shape_cast %168 : vector<1x16x256xf32> to vector<16x256xf32>
    %170 = arith.mulf %167, %169 : vector<16x256xf32>
    %171 = arith.truncf %170 : vector<16x256xf32> to vector<16x256xbf16>
    %c128_146 = arith.constant 128 : index
    %c0_147 = arith.constant 0 : index
    %172 = vector.load %arg6[%c128_146, %c0_147] : memref<144x256xbf16, #tpu.memory_space<vmem>>, vector<16x256xbf16>
    tpu.vector_store %arg6[%c128_146, %c0_147], %171 {strides = array<i32>} : memref<144x256xbf16, #tpu.memory_space<vmem>>, vector<16x256xbf16>,
    %c2_148 = arith.constant 2 : index
    %c0_149 = arith.constant 0 : index
    %c0_150 = arith.constant 0 : index
    %173 = vector.load %arg3[%c2_148, %c0_149, %c0_150] : memref<4x16x144xbf16, #tpu.memory_space<vmem>>, vector<1x16x144xbf16>
    %174 = vector.shape_cast %173 : vector<1x16x144xbf16> to vector<16x144xbf16>
    %c0_151 = arith.constant 0 : index
    %c0_152 = arith.constant 0 : index
    %175 = vector.load %arg6[%c0_151, %c0_152] : memref<144x256xbf16, #tpu.memory_space<vmem>>, vector<144x256xbf16>
    %cst_153 = arith.constant dense<0.000000e+00> : vector<16x256xf32>
    %176 = tpu.matmul %174, %175, %cst_153 {dimension_numbers = #tpu.dot_dimension_numbers<[1], [0], [0], [1], [0, 0, 1, 1], [], []>} : vector<16x144xbf16>, vector<144x256xbf16>, vector<16x256xf32> -> vector<16x256xf32>
    %c2_154 = arith.constant 2 : index
    %c0_155 = arith.constant 0 : index
    %c0_156 = arith.constant 0 : index
    %177 = vector.load %arg4[%c2_154, %c0_155, %c0_156] : memref<4x16x1xf32, #tpu.memory_space<vmem>>, vector<1x16x1xf32>
    %178 = vector.shape_cast %177 : vector<1x16x1xf32> to vector<16x1xf32>
    %179 = vector.broadcast %178 : vector<16x1xf32> to vector<16x256xf32>
    %180 = arith.addf %176, %179 : vector<16x256xf32>
    %cst_157 = arith.constant 0.000000e+00 : f32
    %181 = vector.broadcast %cst_157 : f32 to vector<16x256xf32>
    %182 = arith.maximumf %180, %181 : vector<16x256xf32>
    %c17_i32_158 = arith.constant 17 : i32
    %183 = tpu.dynamic_rotate %182 by %c17_i32_158 dim 1 : vector<16x256xf32>, i32 -> vector<16x256xf32>
    %c0_159 = arith.constant 0 : index
    %c0_160 = arith.constant 0 : index
    %c0_161 = arith.constant 0 : index
    %184 = vector.load %arg2[%c0_159, %c0_160, %c0_161] : memref<9x16x256xf32, #tpu.memory_space<vmem>>, vector<1x16x256xf32>
    %185 = vector.shape_cast %184 : vector<1x16x256xf32> to vector<16x256xf32>
    %186 = arith.mulf %183, %185 : vector<16x256xf32>
    %187 = arith.truncf %186 : vector<16x256xf32> to vector<16x256xbf16>
    %c0_162 = arith.constant 0 : index
    %c0_163 = arith.constant 0 : index
    %188 = vector.load %arg6[%c0_162, %c0_163] : memref<144x256xbf16, #tpu.memory_space<vmem>>, vector<16x256xbf16>
    tpu.vector_store %arg6[%c0_162, %c0_163], %187 {strides = array<i32>} : memref<144x256xbf16, #tpu.memory_space<vmem>>, vector<16x256xbf16>,
    %c16_i32_164 = arith.constant 16 : i32
    %189 = tpu.dynamic_rotate %182 by %c16_i32_164 dim 1 : vector<16x256xf32>, i32 -> vector<16x256xf32>
    %c1_165 = arith.constant 1 : index
    %c0_166 = arith.constant 0 : index
    %c0_167 = arith.constant 0 : index
    %190 = vector.load %arg2[%c1_165, %c0_166, %c0_167] : memref<9x16x256xf32, #tpu.memory_space<vmem>>, vector<1x16x256xf32>
    %191 = vector.shape_cast %190 : vector<1x16x256xf32> to vector<16x256xf32>
    %192 = arith.mulf %189, %191 : vector<16x256xf32>
    %193 = arith.truncf %192 : vector<16x256xf32> to vector<16x256xbf16>
    %c16_168 = arith.constant 16 : index
    %c0_169 = arith.constant 0 : index
    %194 = vector.load %arg6[%c16_168, %c0_169] : memref<144x256xbf16, #tpu.memory_space<vmem>>, vector<16x256xbf16>
    tpu.vector_store %arg6[%c16_168, %c0_169], %193 {strides = array<i32>} : memref<144x256xbf16, #tpu.memory_space<vmem>>, vector<16x256xbf16>,
    %c15_i32_170 = arith.constant 15 : i32
    %195 = tpu.dynamic_rotate %182 by %c15_i32_170 dim 1 : vector<16x256xf32>, i32 -> vector<16x256xf32>
    %c2_171 = arith.constant 2 : index
    %c0_172 = arith.constant 0 : index
    %c0_173 = arith.constant 0 : index
    %196 = vector.load %arg2[%c2_171, %c0_172, %c0_173] : memref<9x16x256xf32, #tpu.memory_space<vmem>>, vector<1x16x256xf32>
    %197 = vector.shape_cast %196 : vector<1x16x256xf32> to vector<16x256xf32>
    %198 = arith.mulf %195, %197 : vector<16x256xf32>
    %199 = arith.truncf %198 : vector<16x256xf32> to vector<16x256xbf16>
    %c32_174 = arith.constant 32 : index
    %c0_175 = arith.constant 0 : index
    %200 = vector.load %arg6[%c32_174, %c0_175] : memref<144x256xbf16, #tpu.memory_space<vmem>>, vector<16x256xbf16>
    tpu.vector_store %arg6[%c32_174, %c0_175], %199 {strides = array<i32>} : memref<144x256xbf16, #tpu.memory_space<vmem>>, vector<16x256xbf16>,
    %c1_i32_176 = arith.constant 1 : i32
    %201 = tpu.dynamic_rotate %182 by %c1_i32_176 dim 1 : vector<16x256xf32>, i32 -> vector<16x256xf32>
    %c3_177 = arith.constant 3 : index
    %c0_178 = arith.constant 0 : index
    %c0_179 = arith.constant 0 : index
    %202 = vector.load %arg2[%c3_177, %c0_178, %c0_179] : memref<9x16x256xf32, #tpu.memory_space<vmem>>, vector<1x16x256xf32>
    %203 = vector.shape_cast %202 : vector<1x16x256xf32> to vector<16x256xf32>
    %204 = arith.mulf %201, %203 : vector<16x256xf32>
    %205 = arith.truncf %204 : vector<16x256xf32> to vector<16x256xbf16>
    %c48_180 = arith.constant 48 : index
    %c0_181 = arith.constant 0 : index
    %206 = vector.load %arg6[%c48_180, %c0_181] : memref<144x256xbf16, #tpu.memory_space<vmem>>, vector<16x256xbf16>
    tpu.vector_store %arg6[%c48_180, %c0_181], %205 {strides = array<i32>} : memref<144x256xbf16, #tpu.memory_space<vmem>>, vector<16x256xbf16>,
    %207 = arith.truncf %182 : vector<16x256xf32> to vector<16x256xbf16>
    %c64_182 = arith.constant 64 : index
    %c0_183 = arith.constant 0 : index
    %208 = vector.load %arg6[%c64_182, %c0_183] : memref<144x256xbf16, #tpu.memory_space<vmem>>, vector<16x256xbf16>
    tpu.vector_store %arg6[%c64_182, %c0_183], %207 {strides = array<i32>} : memref<144x256xbf16, #tpu.memory_space<vmem>>, vector<16x256xbf16>,
    %c255_i32_184 = arith.constant 255 : i32
    %209 = tpu.dynamic_rotate %182 by %c255_i32_184 dim 1 : vector<16x256xf32>, i32 -> vector<16x256xf32>
    %c5_185 = arith.constant 5 : index
    %c0_186 = arith.constant 0 : index
    %c0_187 = arith.constant 0 : index
    %210 = vector.load %arg2[%c5_185, %c0_186, %c0_187] : memref<9x16x256xf32, #tpu.memory_space<vmem>>, vector<1x16x256xf32>
    %211 = vector.shape_cast %210 : vector<1x16x256xf32> to vector<16x256xf32>
    %212 = arith.mulf %209, %211 : vector<16x256xf32>
    %213 = arith.truncf %212 : vector<16x256xf32> to vector<16x256xbf16>
    %c80_188 = arith.constant 80 : index
    %c0_189 = arith.constant 0 : index
    %214 = vector.load %arg6[%c80_188, %c0_189] : memref<144x256xbf16, #tpu.memory_space<vmem>>, vector<16x256xbf16>
    tpu.vector_store %arg6[%c80_188, %c0_189], %213 {strides = array<i32>} : memref<144x256xbf16, #tpu.memory_space<vmem>>, vector<16x256xbf16>,
    %c241_i32_190 = arith.constant 241 : i32
    %215 = tpu.dynamic_rotate %182 by %c241_i32_190 dim 1 : vector<16x256xf32>, i32 -> vector<16x256xf32>
    %c6_191 = arith.constant 6 : index
    %c0_192 = arith.constant 0 : index
    %c0_193 = arith.constant 0 : index
    %216 = vector.load %arg2[%c6_191, %c0_192, %c0_193] : memref<9x16x256xf32, #tpu.memory_space<vmem>>, vector<1x16x256xf32>
    %217 = vector.shape_cast %216 : vector<1x16x256xf32> to vector<16x256xf32>
    %218 = arith.mulf %215, %217 : vector<16x256xf32>
    %219 = arith.truncf %218 : vector<16x256xf32> to vector<16x256xbf16>
    %c96_194 = arith.constant 96 : index
    %c0_195 = arith.constant 0 : index
    %220 = vector.load %arg6[%c96_194, %c0_195] : memref<144x256xbf16, #tpu.memory_space<vmem>>, vector<16x256xbf16>
    tpu.vector_store %arg6[%c96_194, %c0_195], %219 {strides = array<i32>} : memref<144x256xbf16, #tpu.memory_space<vmem>>, vector<16x256xbf16>,
    %c240_i32_196 = arith.constant 240 : i32
    %221 = tpu.dynamic_rotate %182 by %c240_i32_196 dim 1 : vector<16x256xf32>, i32 -> vector<16x256xf32>
    %c7_197 = arith.constant 7 : index
    %c0_198 = arith.constant 0 : index
    %c0_199 = arith.constant 0 : index
    %222 = vector.load %arg2[%c7_197, %c0_198, %c0_199] : memref<9x16x256xf32, #tpu.memory_space<vmem>>, vector<1x16x256xf32>
    %223 = vector.shape_cast %222 : vector<1x16x256xf32> to vector<16x256xf32>
    %224 = arith.mulf %221, %223 : vector<16x256xf32>
    %225 = arith.truncf %224 : vector<16x256xf32> to vector<16x256xbf16>
    %c112_200 = arith.constant 112 : index
    %c0_201 = arith.constant 0 : index
    %226 = vector.load %arg6[%c112_200, %c0_201] : memref<144x256xbf16, #tpu.memory_space<vmem>>, vector<16x256xbf16>
    tpu.vector_store %arg6[%c112_200, %c0_201], %225 {strides = array<i32>} : memref<144x256xbf16, #tpu.memory_space<vmem>>, vector<16x256xbf16>,
    %c239_i32_202 = arith.constant 239 : i32
    %227 = tpu.dynamic_rotate %182 by %c239_i32_202 dim 1 : vector<16x256xf32>, i32 -> vector<16x256xf32>
    %c8_203 = arith.constant 8 : index
    %c0_204 = arith.constant 0 : index
    %c0_205 = arith.constant 0 : index
    %228 = vector.load %arg2[%c8_203, %c0_204, %c0_205] : memref<9x16x256xf32, #tpu.memory_space<vmem>>, vector<1x16x256xf32>
    %229 = vector.shape_cast %228 : vector<1x16x256xf32> to vector<16x256xf32>
    %230 = arith.mulf %227, %229 : vector<16x256xf32>
    %231 = arith.truncf %230 : vector<16x256xf32> to vector<16x256xbf16>
    %c128_206 = arith.constant 128 : index
    %c0_207 = arith.constant 0 : index
    %232 = vector.load %arg6[%c128_206, %c0_207] : memref<144x256xbf16, #tpu.memory_space<vmem>>, vector<16x256xbf16>
    tpu.vector_store %arg6[%c128_206, %c0_207], %231 {strides = array<i32>} : memref<144x256xbf16, #tpu.memory_space<vmem>>, vector<16x256xbf16>,
    %c3_208 = arith.constant 3 : index
    %c0_209 = arith.constant 0 : index
    %c0_210 = arith.constant 0 : index
    %233 = vector.load %arg3[%c3_208, %c0_209, %c0_210] : memref<4x16x144xbf16, #tpu.memory_space<vmem>>, vector<1x16x144xbf16>
    %234 = vector.shape_cast %233 : vector<1x16x144xbf16> to vector<16x144xbf16>
    %c0_211 = arith.constant 0 : index
    %c0_212 = arith.constant 0 : index
    %235 = vector.load %arg6[%c0_211, %c0_212] : memref<144x256xbf16, #tpu.memory_space<vmem>>, vector<144x256xbf16>
    %cst_213 = arith.constant dense<0.000000e+00> : vector<16x256xf32>
    %236 = tpu.matmul %234, %235, %cst_213 {dimension_numbers = #tpu.dot_dimension_numbers<[1], [0], [0], [1], [0, 0, 1, 1], [], []>} : vector<16x144xbf16>, vector<144x256xbf16>, vector<16x256xf32> -> vector<16x256xf32>
    %c3_214 = arith.constant 3 : index
    %c0_215 = arith.constant 0 : index
    %c0_216 = arith.constant 0 : index
    %237 = vector.load %arg4[%c3_214, %c0_215, %c0_216] : memref<4x16x1xf32, #tpu.memory_space<vmem>>, vector<1x16x1xf32>
    %238 = vector.shape_cast %237 : vector<1x16x1xf32> to vector<16x1xf32>
    %239 = vector.broadcast %238 : vector<16x1xf32> to vector<16x256xf32>
    %240 = arith.addf %236, %239 : vector<16x256xf32>
    %241 = arith.addf %240, %122 : vector<16x256xf32>
    %cst_217 = arith.constant 0.000000e+00 : f32
    %242 = vector.broadcast %cst_217 : f32 to vector<16x256xf32>
    %243 = arith.maximumf %241, %242 : vector<16x256xf32>
    %c0_218 = arith.constant 0 : index
    %c0_219 = arith.constant 0 : index
    %c0_220 = arith.constant 0 : index
    %244 = vector.load %arg5[%c0_218, %c0_219, %c0_220] : memref<1x16x256xf32, #tpu.memory_space<vmem>>, vector<1x16x256xf32>
    %245 = vector.shape_cast %244 : vector<1x16x256xf32> to vector<16x256xf32>
    %246 = vector.shape_cast %243 : vector<16x256xf32> to vector<1x16x256xf32>
    tpu.vector_store %arg5[%c0_218, %c0_219, %c0_220], %246 {strides = array<i32>} : memref<1x16x256xf32, #tpu.memory_space<vmem>>, vector<1x16x256xf32>,
    return
  }
  func.func @transform_0(%arg0: i32) -> (i32, i32, i32) {
    %c0_i32 = arith.constant 0 : i32
    %c0_i32_0 = arith.constant 0 : i32
    %c0_i32_1 = arith.constant 0 : i32
    return %arg0, %c0_i32, %c0_i32_0 : i32, i32, i32
  }
  func.func @transform_1(%arg0: i32) -> (i32, i32, i32) {
    %c0_i32 = arith.constant 0 : i32
    %c0_i32_0 = arith.constant 0 : i32
    %c0_i32_1 = arith.constant 0 : i32
    %c0_i32_2 = arith.constant 0 : i32
    return %c0_i32, %c0_i32_0, %c0_i32_1 : i32, i32, i32
  }
  func.func @transform_2(%arg0: i32) -> (i32, i32, i32) {
    %c0_i32 = arith.constant 0 : i32
    %c0_i32_0 = arith.constant 0 : i32
    %c0_i32_1 = arith.constant 0 : i32
    %c0_i32_2 = arith.constant 0 : i32
    return %c0_i32, %c0_i32_0, %c0_i32_1 : i32, i32, i32
  }
  func.func @transform_3(%arg0: i32) -> (i32, i32, i32) {
    %c0_i32 = arith.constant 0 : i32
    %c0_i32_0 = arith.constant 0 : i32
    %c0_i32_1 = arith.constant 0 : i32
    %c0_i32_2 = arith.constant 0 : i32
    return %c0_i32, %c0_i32_0, %c0_i32_1 : i32, i32, i32
  }
  func.func @transform_4(%arg0: i32) -> (i32, i32, i32) {
    %c0_i32 = arith.constant 0 : i32
    %c0_i32_0 = arith.constant 0 : i32
    %c0_i32_1 = arith.constant 0 : i32
    return %arg0, %c0_i32, %c0_i32_0 : i32, i32, i32
  }
}

</mosaic_0001>

<llo_original>
// kernel: _lambda_.1
$region0: #{_lambda_.1}
  #allocation0 [shape = 'u32[]', space=smem, size = 0x4, offset = 0x4, fixed_abs, tag = 'smem constant byte address 0x4 - core index']
  #allocation1 [shape = 'u32[72,128]{1,0:T(1,128)}', space=vmem, size = 0x9000, scoped, tag = 'internal scratch']
  #allocation2 [shape = 'bf16[144,256]{1,0:T(8,128)(2,1)}', space=vmem, size = 0x12000, scoped, tag = 'scratch operand']
  %s0 = inlined_call_operand.vmem [shape: f32[2,16,256], index: 0, kind: input, shape index: {}]
  %s1 = inlined_call_operand.vmem [shape: f32[9,16,256], index: 1, kind: input, shape index: {}]
  %s2 = inlined_call_operand.vmem [shape: bf16[4,16,144], index: 2, kind: input, shape index: {}]
  %s3 = inlined_call_operand.vmem [shape: f32[4,16,1], index: 3, kind: input, shape index: {}]
  %s4 = inlined_call_operand.vmem [shape: f32[2,16,256], index: 4, kind: output, shape index: {}]
  %s5 = sld [smem:[#allocation0]]
  $region49: #{_lambda_.1} parent=0
    _
  %s7 = ssub.s32 1, %s5
  %s8 = scalar_select 0, %s7, %s5
  loop: start=0, step=1, limit=4
  $region2: #{_lambda_.1} parent=0 // loop_pre_header
    _
  $region3: #{_lambda_.1} parent=0 // loop_header
    %s10 = sphi 0, %s14
    %p11 = scmp.ge.s32.totalorder %s10, 4
    %s20 = sphi 0, %s22
    %s23 = sphi 0, %s20
    %s24 = sphi 0, %s23
    %s40 = sphi 0, %s24
    %s44 = sphi 0, %s44
    %s46 = sphi 0, %s44
    %s47 = sphi 0, %s46
    %s61 = sphi 0, %s47
    %s65 = sphi 0, %s65
    %s67 = sphi 0, %s65
    %s68 = sphi 0, %s67
    %s82 = sphi 0, %s68
    %s86 = sphi 0, %s86
    %s88 = sphi 0, %s86
    %s89 = sphi 0, %s88
    %s103 = sphi 0, %s89
    %s109 = sphi 0, %s111
    %s112 = sphi 0, %s109
    %s113 = sphi 0, %s112
    %s129 = sphi 0, %s113
  $region4: #{_lambda_.1} parent=0 // loop_header_branch
    %13 = sbr.rel (%p11) target = $region8
  $region5: #{_lambda_.1} parent=0 // loop_body
    %s15 = ssub.s32 %s10, 1
    %s16 = ssub.s32 %s10, 2
    %s17 = sadd.s32 %s10, 1
    %s18 = ssub.s32 %s10, %s17
    %p19 = scmp.eq.s32.totalorder %s18, 0
    %s21 = sadd.s32 %s20, 1
    %s22 = scalar_select %p19, %s20, %s21
    %p25 = pneg %p19
    %p26 = scmp.eq.s32.totalorder %s10, 1
    %p27 = por %p25, %p26
    %p28 = scmp.ne.s32.totalorder %s20, %s23
    %p29 = scmp.eq.s32.totalorder %s10, 0
    %p30 = por %p28, %p29
    %p31 = scmp.ne.s32.totalorder %s20, %s23
    %p32 = scmp.eq.s32.totalorder %s15, 1
    %p33 = por %p31, %p32
    %p34 = scmp.ne.s32.totalorder %s23, %s24
    %p35 = scmp.eq.s32.totalorder %s15, 0
    %p36 = por %p34, %p35
    %p37 = scmp.ne.s32.totalorder %s23, %s24
    %p38 = scmp.eq.s32.totalorder %s16, 1
    %p39 = por %p37, %p38
    %p41 = scmp.ne.s32.totalorder %s24, %s40
    %p42 = scmp.eq.s32.totalorder %s16, 0
    %p43 = por %p41, %p42
    %s45 = sadd.s32 %s44, 1
    %p48 = scmp.eq.s32.totalorder %s10, 1
    %p49 = scmp.ne.s32.totalorder %s44, %s46
    %p50 = scmp.eq.s32.totalorder %s10, 0
    %p51 = por %p49, %p50
    %p52 = scmp.ne.s32.totalorder %s44, %s46
    %p53 = scmp.eq.s32.totalorder %s15, 1
    %p54 = por %p52, %p53
    %p55 = scmp.ne.s32.totalorder %s46, %s47
    %p56 = scmp.eq.s32.totalorder %s15, 0
    %p57 = por %p55, %p56
    %p58 = scmp.ne.s32.totalorder %s46, %s47
    %p59 = scmp.eq.s32.totalorder %s16, 1
    %p60 = por %p58, %p59
    %p62 = scmp.ne.s32.totalorder %s47, %s61
    %p63 = scmp.eq.s32.totalorder %s16, 0
    %p64 = por %p62, %p63
    %s66 = sadd.s32 %s65, 1
    %p69 = scmp.eq.s32.totalorder %s10, 1
    %p70 = scmp.ne.s32.totalorder %s65, %s67
    %p71 = scmp.eq.s32.totalorder %s10, 0
    %p72 = por %p70, %p71
    %p73 = scmp.ne.s32.totalorder %s65, %s67
    %p74 = scmp.eq.s32.totalorder %s15, 1
    %p75 = por %p73, %p74
    %p76 = scmp.ne.s32.totalorder %s67, %s68
    %p77 = scmp.eq.s32.totalorder %s15, 0
    %p78 = por %p76, %p77
    %p79 = scmp.ne.s32.totalorder %s67, %s68
    %p80 = scmp.eq.s32.totalorder %s16, 1
    %p81 = por %p79, %p80
    %p83 = scmp.ne.s32.totalorder %s68, %s82
    %p84 = scmp.eq.s32.totalorder %s16, 0
    %p85 = por %p83, %p84
    %s87 = sadd.s32 %s86, 1
    %p90 = scmp.eq.s32.totalorder %s10, 1
    %p91 = scmp.ne.s32.totalorder %s86, %s88
    %p92 = scmp.eq.s32.totalorder %s10, 0
    %p93 = por %p91, %p92
    %p94 = scmp.ne.s32.totalorder %s86, %s88
    %p95 = scmp.eq.s32.totalorder %s15, 1
    %p96 = por %p94, %p95
    %p97 = scmp.ne.s32.totalorder %s88, %s89
    %p98 = scmp.eq.s32.totalorder %s15, 0
    %p99 = por %p97, %p98
    %p100 = scmp.ne.s32.totalorder %s88, %s89
    %p101 = scmp.eq.s32.totalorder %s16, 1
    %p102 = por %p100, %p101
    %p104 = scmp.ne.s32.totalorder %s89, %s103
    %p105 = scmp.eq.s32.totalorder %s16, 0
    %p106 = por %p104, %p105
    %s107 = ssub.s32 %s10, %s17
    %p108 = scmp.eq.s32.totalorder %s107, 0
    %s110 = sadd.s32 %s109, 1
    %s111 = scalar_select %p108, %s109, %s110
    %p114 = pneg %p108
    %p115 = scmp.eq.s32.totalorder %s10, 1
    %p116 = por %p114, %p115
    %p117 = scmp.ne.s32.totalorder %s109, %s112
    %p118 = scmp.eq.s32.totalorder %s10, 0
    %p119 = por %p117, %p118
    %p120 = scmp.ne.s32.totalorder %s109, %s112
    %p121 = scmp.eq.s32.totalorder %s15, 1
    %p122 = por %p120, %p121
    %p123 = scmp.ne.s32.totalorder %s112, %s113
    %p124 = scmp.eq.s32.totalorder %s15, 0
    %p125 = por %p123, %p124
    %p126 = scmp.ne.s32.totalorder %s112, %s113
    %p127 = scmp.eq.s32.totalorder %s16, 1
    %p128 = por %p126, %p127
    %p130 = scmp.ne.s32.totalorder %s113, %s129
    %p131 = scmp.eq.s32.totalorder %s16, 0
    %p132 = por %p130, %p131
    %p133 = scmp.le.s32.totalorder 1, %s10
    %p134 = scmp.lt.s32.totalorder %s10, 3
    %p135 = pnand %p133, %p134
    %p136 = pneg %p135
    // Predicated region
    $region9: #{_lambda_.1} parent=5 // pred_check
      _
    $region10: #{_lambda_.1} parent=5 // pred_check_branch
      %138 = sbr.rel (%p135) target = $region12
    $region11: #{_lambda_.1} parent=5 // pred_region
      %s139 = ssub.s32 %s10, 1
      // Predicated region
      $region13: #{_lambda_.1} parent=11 // pred_check
        %p140 = pneg %p57
      $region14: #{_lambda_.1} parent=11 // pred_check_branch
        %142 = sbr.rel (%p140) target = $region16
      $region15: #{_lambda_.1} parent=11 // pred_region
        _
      $region16: #{_lambda_.1} parent=11 // pred_fallthru
        _
      // Predicated region
      $region17: #{_lambda_.1} parent=11 // pred_check
        %p143 = pneg %p78
      $region18: #{_lambda_.1} parent=11 // pred_check_branch
        %145 = sbr.rel (%p143) target = $region20
      $region19: #{_lambda_.1} parent=11 // pred_region
        _
      $region20: #{_lambda_.1} parent=11 // pred_fallthru
        _
      // Predicated region
      $region21: #{_lambda_.1} parent=11 // pred_check
        %p146 = pneg %p99
      $region22: #{_lambda_.1} parent=11 // pred_check_branch
        %148 = sbr.rel (%p146) target = $region24
      $region23: #{_lambda_.1} parent=11 // pred_region
        _
      $region24: #{_lambda_.1} parent=11 // pred_fallthru
        _
    $region12: #{_lambda_.1} parent=5 // pred_fallthru
      _
    %p149 = scmp.lt.s32.totalorder %s10, 2
    // Predicated region
    $region25: #{_lambda_.1} parent=5 // pred_check
      %p150 = pneg %p149
    $region26: #{_lambda_.1} parent=5 // pred_check_branch
      %152 = sbr.rel (%p150) target = $region28
    $region27: #{_lambda_.1} parent=5 // pred_region
      // Predicated region
      $region29: #{_lambda_.1} parent=27 // pred_check
        %p153 = pneg %p30
      $region30: #{_lambda_.1} parent=27 // pred_check_branch
        %155 = sbr.rel (%p153) target = $region32
      $region31: #{_lambda_.1} parent=27 // pred_region
        %p156 = scmp.lt.s32.totalorder %s10, 1
        %s157 = scalar_select %p156, %s10, 1
        %s158 = smul.addr %s157, 4
        %s159 = smul.addr %s158, 8
        %s160 = scalar_lea.vmem %s0, %s159
      $region32: #{_lambda_.1} parent=27 // pred_fallthru
        _
    $region28: #{_lambda_.1} parent=5 // pred_fallthru
      _
    %p161 = scmp.le.s32.totalorder 1, %s10
    %p162 = scmp.lt.s32.totalorder %s10, 3
    %p163 = pnand %p161, %p162
    %p164 = pneg %p163
    // Predicated region
    $region33: #{_lambda_.1} parent=5 // pred_check
      _
    $region34: #{_lambda_.1} parent=5 // pred_check_branch
      %166 = sbr.rel (%p163) target = $region36
    $region35: #{_lambda_.1} parent=5 // pred_region
      %s167 = ssub.s32 %s10, 1
      %p168 = scmp.lt.s32.totalorder %s15, 1
      %s169 = scalar_select %p168, %s15, 1
      %s170 = smul.addr %s169, 4
      %s171 = smul.addr %s170, 8
      %s172 = scalar_lea.vmem %s0, %s171
      %p173 = pneg %p36
      %p174 = pneg %p33
      %p175 = pneg %p57
      %p176 = pneg %p54
      %p177 = pneg %p78
      %p178 = pneg %p75
      %p179 = pneg %p99
      %p180 = pneg %p96
      %p181 = pneg %p125
      %p182 = pneg %p122
      %p183 = scmp.lt.s32.totalorder %s15, 1
      %s184 = scalar_select %p183, %s15, 1
      %s185 = smul.addr %s184, 4
      %s186 = smul.addr %s185, 8
      %s187 = scalar_lea.vmem %s4, %s186
      %p188 = scmp.lt.s32.totalorder %s15, 1
      %s189 = scalar_select %p188, %s15, 1
      %s190 = smul.addr %s189, 4
      %s191 = smul.addr %s190, 8
      %s192 = scalar_lea.vmem %s0, %s191
      %p193 = scmp.lt.s32.totalorder %s15, 1
      %s194 = scalar_select %p193, %s15, 1
      %s195 = smul.addr %s194, 4
      %s196 = smul.addr %s195, 8
      %s197 = scalar_lea.vmem %s4, %s196
      %v199 = vld [vmem:[%s192] sm:$0xff]
      %v200 = vld [vmem:[%s192 + $0x8] sm:$0xff]
      %v201 = vld [vmem:[%s192 + $0x10] sm:$0xff]
      %v202 = vld [vmem:[%s192 + $0x18] sm:$0xff]
      %203 = vrot.lane.b32.xlu0 %v199, 17
      %v204 = vpop.permute.xlu0 %203
      %205 = vrot.lane.b32.xlu0 %v201, 17
      %v206 = vpop.permute.xlu0 %205
      %207 = vrot.lane.b32.xlu0 %v200, 17
      %v208 = vpop.permute.xlu0 %207
      %209 = vrot.lane.b32.xlu0 %v202, 17
      %v210 = vpop.permute.xlu0 %209
      %v211 = vlaneseq
      %v212 = vand.u32 %v211, 127
      %vm213 = vcmp.lt.s32.totalorder %v212, 17
      %v214 = vsel %vm213, %v204, %v208
      %v215 = vsel %vm213, %v206, %v210
      %v216 = vsel %vm213, %v208, %v204
      %v217 = vsel %vm213, %v210, %v206
      %v218 = vld [vmem:[%s1] sm:$0xff]
      %v219 = vld [vmem:[%s1 + $0x8] sm:$0xff]
      %v220 = vld [vmem:[%s1 + $0x10] sm:$0xff]
      %v221 = vld [vmem:[%s1 + $0x18] sm:$0xff]
      %v222 = vmul.f32 %v216, %v218
      %v223 = vmul.f32 %v214, %v219
      %v224 = vmul.f32 %v217, %v220
      %v225 = vmul.f32 %v215, %v221
      %v226 = vpack.c.bf16 %v223, %v222
      %v227 = vpack.c.bf16 %v225, %v224
      %228 = vst [vmem:[#allocation2] sm:$0xff] %v226
      %229 = vst [vmem:[#allocation2 + $0x8] sm:$0xff] %v227
      %230 = vrot.lane.b32.xlu0 %v199, 16
      %v231 = vpop.permute.xlu0 %230
      %232 = vrot.lane.b32.xlu0 %v201, 16
      %v233 = vpop.permute.xlu0 %232
      %234 = vrot.lane.b32.xlu0 %v200, 16
      %v235 = vpop.permute.xlu0 %234
      %236 = vrot.lane.b32.xlu0 %v202, 16
      %v237 = vpop.permute.xlu0 %236
      %vm238 = vcmp.lt.s32.totalorder %v212, 16
      %v239 = vsel %vm238, %v231, %v235
      %v240 = vsel %vm238, %v233, %v237
      %v241 = vsel %vm238, %v235, %v231
      %v242 = vsel %vm238, %v237, %v233
      %s243 = scalar_lea.vmem %s1, 32
      %v244 = vld [vmem:[%s243] sm:$0xff]
      %v245 = vld [vmem:[%s243 + $0x8] sm:$0xff]
      %v246 = vld [vmem:[%s243 + $0x10] sm:$0xff]
      %v247 = vld [vmem:[%s243 + $0x18] sm:$0xff]
      %v248 = vmul.f32 %v241, %v244
      %v249 = vmul.f32 %v239, %v245
      %v250 = vmul.f32 %v242, %v246
      %v251 = vmul.f32 %v240, %v247
      %v252 = vpack.c.bf16 %v249, %v248
      %v253 = vpack.c.bf16 %v251, %v250
      %254 = vst [vmem:[#allocation2 + $0x10] sm:$0xff] %v252
      %255 = vst [vmem:[#allocation2 + $0x18] sm:$0xff] %v253
      %256 = vrot.lane.b32.xlu0 %v199, 15
      %v257 = vpop.permute.xlu0 %256
      %258 = vrot.lane.b32.xlu0 %v201, 15
      %v259 = vpop.permute.xlu0 %258
      %260 = vrot.lane.b32.xlu0 %v200, 15
      %v261 = vpop.permute.xlu0 %260
      %262 = vrot.lane.b32.xlu0 %v202, 15
      %v263 = vpop.permute.xlu0 %262
      %vm264 = vcmp.lt.s32.totalorder %v212, 15
      %v265 = vsel %vm264, %v257, %v261
      %v266 = vsel %vm264, %v259, %v263
      %v267 = vsel %vm264, %v261, %v257
      %v268 = vsel %vm264, %v263, %v259
      %s269 = scalar_lea.vmem %s1, 64
      %v270 = vld [vmem:[%s269] sm:$0xff]
      %v271 = vld [vmem:[%s269 + $0x8] sm:$0xff]
      %v272 = vld [vmem:[%s269 + $0x10] sm:$0xff]
      %v273 = vld [vmem:[%s269 + $0x18] sm:$0xff]
      %v274 = vmul.f32 %v267, %v270
      %v275 = vmul.f32 %v265, %v271
      %v276 = vmul.f32 %v268, %v272
      %v277 = vmul.f32 %v266, %v273
      %v278 = vpack.c.bf16 %v275, %v274
      %v279 = vpack.c.bf16 %v277, %v276
      %280 = vst [vmem:[#allocation2 + $0x20] sm:$0xff] %v278
      %281 = vst [vmem:[#allocation2 + $0x28] sm:$0xff] %v279
      %282 = vrot.lane.b32.xlu0 %v199, 1
      %v283 = vpop.permute.xlu0 %282
      %284 = vrot.lane.b32.xlu0 %v201, 1
      %v285 = vpop.permute.xlu0 %284
      %286 = vrot.lane.b32.xlu0 %v200, 1
      %v287 = vpop.permute.xlu0 %286
      %288 = vrot.lane.b32.xlu0 %v202, 1
      %v289 = vpop.permute.xlu0 %288
      %vm290 = vcmp.lt.s32.totalorder %v212, 1
      %v291 = vsel %vm290, %v283, %v287
      %v292 = vsel %vm290, %v285, %v289
      %v293 = vsel %vm290, %v287, %v283
      %v294 = vsel %vm290, %v289, %v285
      %s295 = scalar_lea.vmem %s1, 96
      %v296 = vld [vmem:[%s295] sm:$0xff]
      %v297 = vld [vmem:[%s295 + $0x8] sm:$0xff]
      %v298 = vld [vmem:[%s295 + $0x10] sm:$0xff]
      %v299 = vld [vmem:[%s295 + $0x18] sm:$0xff]
      %v300 = vmul.f32 %v293, %v296
      %v301 = vmul.f32 %v291, %v297
      %v302 = vmul.f32 %v294, %v298
      %v303 = vmul.f32 %v292, %v299
      %v304 = vpack.c.bf16 %v301, %v300
      %v305 = vpack.c.bf16 %v303, %v302
      %306 = vst [vmem:[#allocation2 + $0x30] sm:$0xff] %v304
      %307 = vst [vmem:[#allocation2 + $0x38] sm:$0xff] %v305
      %v308 = vpack.c.bf16 %v200, %v199
      %v309 = vpack.c.bf16 %v202, %v201
      %310 = vst [vmem:[#allocation2 + $0x40] sm:$0xff] %v308
      %311 = vst [vmem:[#allocation2 + $0x48] sm:$0xff] %v309
      %312 = vrot.lane.b32.xlu0 %v199, 127
      %v313 = vpop.permute.xlu0 %312
      %314 = vrot.lane.b32.xlu0 %v201, 127
      %v315 = vpop.permute.xlu0 %314
      %316 = vrot.lane.b32.xlu0 %v200, 127
      %v317 = vpop.permute.xlu0 %316
      %318 = vrot.lane.b32.xlu0 %v202, 127
      %v319 = vpop.permute.xlu0 %318
      %vm320 = vcmp.lt.s32.totalorder %v212, 127
      %v321 = vsel %vm320, %v313, %v317
      %v322 = vsel %vm320, %v315, %v319
      %v323 = vsel %vm320, %v317, %v313
      %v324 = vsel %vm320, %v319, %v315
      %s325 = scalar_lea.vmem %s1, 160
      %v326 = vld [vmem:[%s325] sm:$0xff]
      %v327 = vld [vmem:[%s325 + $0x8] sm:$0xff]
      %v328 = vld [vmem:[%s325 + $0x10] sm:$0xff]
      %v329 = vld [vmem:[%s325 + $0x18] sm:$0xff]
      %v330 = vmul.f32 %v321, %v326
      %v331 = vmul.f32 %v323, %v327
      %v332 = vmul.f32 %v322, %v328
      %v333 = vmul.f32 %v324, %v329
      %v334 = vpack.c.bf16 %v331, %v330
      %v335 = vpack.c.bf16 %v333, %v332
      %336 = vst [vmem:[#allocation2 + $0x50] sm:$0xff] %v334
      %337 = vst [vmem:[#allocation2 + $0x58] sm:$0xff] %v335
      %338 = vrot.lane.b32.xlu0 %v199, 113
      %v339 = vpop.permute.xlu0 %338
      %340 = vrot.lane.b32.xlu0 %v201, 113
      %v341 = vpop.permute.xlu0 %340
      %342 = vrot.lane.b32.xlu0 %v200, 113
      %v343 = vpop.permute.xlu0 %342
      %344 = vrot.lane.b32.xlu0 %v202, 113
      %v345 = vpop.permute.xlu0 %344
      %vm346 = vcmp.lt.s32.totalorder %v212, 113
      %v347 = vsel %vm346, %v339, %v343
      %v348 = vsel %vm346, %v341, %v345
      %v349 = vsel %vm346, %v343, %v339
      %v350 = vsel %vm346, %v345, %v341
      %s351 = scalar_lea.vmem %s1, 192
      %v352 = vld [vmem:[%s351] sm:$0xff]
      %v353 = vld [vmem:[%s351 + $0x8] sm:$0xff]
      %v354 = vld [vmem:[%s351 + $0x10] sm:$0xff]
      %v355 = vld [vmem:[%s351 + $0x18] sm:$0xff]
      %v356 = vmul.f32 %v347, %v352
      %v357 = vmul.f32 %v349, %v353
      %v358 = vmul.f32 %v348, %v354
      %v359 = vmul.f32 %v350, %v355
      %v360 = vpack.c.bf16 %v357, %v356
      %v361 = vpack.c.bf16 %v359, %v358
      %362 = vst [vmem:[#allocation2 + $0x60] sm:$0xff] %v360
      %363 = vst [vmem:[#allocation2 + $0x68] sm:$0xff] %v361
      %364 = vrot.lane.b32.xlu0 %v199, 112
      %v365 = vpop.permute.xlu0 %364
      %366 = vrot.lane.b32.xlu0 %v201, 112
      %v367 = vpop.permute.xlu0 %366
      %368 = vrot.lane.b32.xlu0 %v200, 112
      %v369 = vpop.permute.xlu0 %368
      %370 = vrot.lane.b32.xlu0 %v202, 112
      %v371 = vpop.permute.xlu0 %370
      %vm372 = vcmp.lt.s32.totalorder %v212, 112
      %v373 = vsel %vm372, %v365, %v369
      %v374 = vsel %vm372, %v367, %v371
      %v375 = vsel %vm372, %v369, %v365
      %v376 = vsel %vm372, %v371, %v367
      %s377 = scalar_lea.vmem %s1, 224
      %v378 = vld [vmem:[%s377] sm:$0xff]
      %v379 = vld [vmem:[%s377 + $0x8] sm:$0xff]
      %v380 = vld [vmem:[%s377 + $0x10] sm:$0xff]
      %v381 = vld [vmem:[%s377 + $0x18] sm:$0xff]
      %v382 = vmul.f32 %v373, %v378
      %v383 = vmul.f32 %v375, %v379
      %v384 = vmul.f32 %v374, %v380
      %v385 = vmul.f32 %v376, %v381
      %v386 = vpack.c.bf16 %v383, %v382
      %v387 = vpack.c.bf16 %v385, %v384
      %388 = vst [vmem:[#allocation2 + $0x70] sm:$0xff] %v386
      %389 = vst [vmem:[#allocation2 + $0x78] sm:$0xff] %v387
      %390 = vrot.lane.b32.xlu0 %v199, 111
      %v391 = vpop.permute.xlu0 %390
      %392 = vrot.lane.b32.xlu0 %v201, 111
      %v393 = vpop.permute.xlu0 %392
      %394 = vrot.lane.b32.xlu0 %v200, 111
      %v395 = vpop.permute.xlu0 %394
      %396 = vrot.lane.b32.xlu0 %v202, 111
      %v397 = vpop.permute.xlu0 %396
      %vm398 = vcmp.lt.s32.totalorder %v212, 111
      %v399 = vsel %vm398, %v391, %v395
      %v400 = vsel %vm398, %v393, %v397
      %v401 = vsel %vm398, %v395, %v391
      %v402 = vsel %vm398, %v397, %v393
      %s403 = scalar_lea.vmem %s1, 256
      %v404 = vld [vmem:[%s403] sm:$0xff]
      %v405 = vld [vmem:[%s403 + $0x8] sm:$0xff]
      %v406 = vld [vmem:[%s403 + $0x10] sm:$0xff]
      %v407 = vld [vmem:[%s403 + $0x18] sm:$0xff]
      %v408 = vmul.f32 %v399, %v404
      %v409 = vmul.f32 %v401, %v405
      %v410 = vmul.f32 %v400, %v406
      %v411 = vmul.f32 %v402, %v407
      %v412 = vpack.c.bf16 %v409, %v408
      %v413 = vpack.c.bf16 %v411, %v410
      %414 = vst [vmem:[#allocation2 + $0x80] sm:$0xff] %v412
      %415 = vst [vmem:[#allocation2 + $0x88] sm:$0xff] %v413
      %v416 = vld [vmem:[%s2] sm:$0xff]
      %v417 = vld [vmem:[%s2 + $0x8] sm:$0xff]
      %v418 = vld [vmem:[#allocation2] sm:$0xff]
      %v419 = vld [vmem:[#allocation2 + $0x8] sm:$0xff]
      %v420 = vld [vmem:[#allocation2 + $0x10] sm:$0xff]
      %v421 = vld [vmem:[#allocation2 + $0x18] sm:$0xff]
      %v422 = vld [vmem:[#allocation2 + $0x20] sm:$0xff]
      %v423 = vld [vmem:[#allocation2 + $0x28] sm:$0xff]
      %v424 = vld [vmem:[#allocation2 + $0x30] sm:$0xff]
      %v425 = vld [vmem:[#allocation2 + $0x38] sm:$0xff]
      %v426 = vld [vmem:[#allocation2 + $0x40] sm:$0xff]
      %v427 = vld [vmem:[#allocation2 + $0x48] sm:$0xff]
      %v428 = vld [vmem:[#allocation2 + $0x50] sm:$0xff]
      %v429 = vld [vmem:[#allocation2 + $0x58] sm:$0xff]
      %v430 = vld [vmem:[#allocation2 + $0x60] sm:$0xff]
      %v431 = vld [vmem:[#allocation2 + $0x68] sm:$0xff]
      %v432 = vld [vmem:[#allocation2 + $0x70] sm:$0xff]
      %v433 = vld [vmem:[#allocation2 + $0x78] sm:$0xff]
      %v434 = vld [vmem:[#allocation2 + $0x80] sm:$0xff]
      %v435 = vld [vmem:[#allocation2 + $0x88] sm:$0xff]
      %v436 = vld [vmem:[%s3] sm:$0xff]
      %v437 = vld [vmem:[%s3 + $0x8] sm:$0xff]
      %439 = vset.pattern.permute.xlu0 0
      %440 = vperm.xlu0 %439, %v436
      %v441 = vpop.permute.xlu0 %440
      %444 = vset.pattern.permute.xlu0 0
      %445 = vperm.xlu0 %444, %v437
      %v446 = vpop.permute.xlu0 %445
      %v450 = vunpack.c.l.b16 %v416
      %v451 = vunpack.c.h.b16 %v416
      %v452 = vunpack.c.l.b16 %v417
      %v453 = vunpack.c.h.b16 %v417
      %v454 = vpack.c.b16 %v452, %v450
      %v455 = vpack.c.b16 %v453, %v451
      %v475 = vunpack.c.l.b16 %v418
      %v476 = vunpack.c.h.b16 %v418
      %v477 = vunpack.c.l.b16 %v419
      %v478 = vunpack.c.h.b16 %v419
      %v479 = vunpack.c.l.b16 %v420
      %v480 = vunpack.c.h.b16 %v420
      %v481 = vunpack.c.l.b16 %v421
      %v482 = vunpack.c.h.b16 %v421
      %v483 = vunpack.c.l.b16 %v422
      %v484 = vunpack.c.h.b16 %v422
      %v485 = vunpack.c.l.b16 %v423
      %v486 = vunpack.c.h.b16 %v423
      %v487 = vunpack.c.l.b16 %v424
      %v488 = vunpack.c.h.b16 %v424
      %v489 = vunpack.c.l.b16 %v425
      %v490 = vunpack.c.h.b16 %v425
      %v491 = vunpack.c.l.b16 %v426
      %v492 = vunpack.c.h.b16 %v426
      %v493 = vunpack.c.l.b16 %v427
      %v494 = vunpack.c.h.b16 %v427
      %v495 = vunpack.c.l.b16 %v428
      %v496 = vunpack.c.h.b16 %v428
      %v497 = vunpack.c.l.b16 %v429
      %v498 = vunpack.c.h.b16 %v429
      %v499 = vunpack.c.l.b16 %v430
      %v500 = vunpack.c.h.b16 %v430
      %v501 = vunpack.c.l.b16 %v431
      %v502 = vunpack.c.h.b16 %v431
      %v503 = vunpack.c.l.b16 %v432
      %v504 = vunpack.c.h.b16 %v432
      %v505 = vunpack.c.l.b16 %v433
      %v506 = vunpack.c.h.b16 %v433
      %v507 = vunpack.c.l.b16 %v434
      %v508 = vunpack.c.h.b16 %v434
      %v509 = vunpack.c.l.b16 %v435
      %v510 = vunpack.c.h.b16 %v435
      %v511 = vpack.c.b16 %v477, %v475
      %v512 = vpack.c.b16 %v478, %v476
      %v513 = vpack.c.b16 %v481, %v479
      %v514 = vpack.c.b16 %v482, %v480
      %v515 = vpack.c.b16 %v485, %v483
      %v516 = vpack.c.b16 %v486, %v484
      %v517 = vpack.c.b16 %v489, %v487
      %v518 = vpack.c.b16 %v490, %v488
      %v519 = vpack.c.b16 %v493, %v491
      %v520 = vpack.c.b16 %v494, %v492
      %v521 = vpack.c.b16 %v497, %v495
      %v522 = vpack.c.b16 %v498, %v496
      %v523 = vpack.c.b16 %v501, %v499
      %v524 = vpack.c.b16 %v502, %v500
      %v525 = vpack.c.b16 %v505, %v503
      %v526 = vpack.c.b16 %v506, %v504
      %v527 = vpack.c.b16 %v509, %v507
      %v528 = vpack.c.b16 %v510, %v508
      %vm547 = vcmask 130048
      %v549 = vsel %vm547, %v455, 0
      %551 = vmatpush.bf16.msra.mxu0 %v525
      %552 = vmatpush.bf16.msra.mxu0 %v523
      %553 = vmatpush.bf16.msra.mxu0 %v521
      %554 = vmatpush.bf16.msra.mxu0 %v519
      %555 = vmatpush.bf16.msra.mxu0 %v517
      %556 = vmatpush.bf16.msra.mxu0 %v515
      %557 = vmatpush.bf16.msra.mxu0 %v513
      %558 = vmatpush.bf16.msra.mxu0 %v511
      %559 = vmatmul.bf16.gmra.mxu0 %v454
      %v560 = vpop.f32.mrf.mxu0
      %v561 = vadd.f32 %v441, %v560
      %v562 = vpop.f32.mrf.mxu0
      %v563 = vadd.f32 %v446, %v562
      %564 = vdwg.mxu0
      %565 = vmatpush.bf16.msra.mxu0 0
      %566 = vmatpush.bf16.msra.mxu0 0
      %567 = vmatpush.bf16.msra.mxu0 0
      %568 = vmatpush.bf16.msra.mxu0 0
      %569 = vmatpush.bf16.msra.mxu0 0
      %570 = vmatpush.bf16.msra.mxu0 0
      %571 = vmatpush.bf16.msra.mxu0 0
      %572 = vmatpush.bf16.msra.mxu0 %v527
      %573 = vmatmul.bf16.gmra.mxu0 %v549
      %v574 = vpop.f32.mrf.mxu0
      %v575 = vadd.f32 %v561, %v574
      %v576 = vpop.f32.mrf.mxu0
      %v577 = vadd.f32 %v563, %v576
      %578 = vdwg.mxu0
      %579 = vmatpush.bf16.msra.mxu0 %v526
      %580 = vmatpush.bf16.msra.mxu0 %v524
      %581 = vmatpush.bf16.msra.mxu0 %v522
      %582 = vmatpush.bf16.msra.mxu0 %v520
      %583 = vmatpush.bf16.msra.mxu0 %v518
      %584 = vmatpush.bf16.msra.mxu0 %v516
      %585 = vmatpush.bf16.msra.mxu0 %v514
      %586 = vmatpush.bf16.msra.mxu0 %v512
      %587 = vmatmul.bf16.gmra.mxu0 %v454
      %v588 = vpop.f32.mrf.mxu0
      %v589 = vadd.f32 %v441, %v588
      %v590 = vpop.f32.mrf.mxu0
      %v591 = vadd.f32 %v446, %v590
      %592 = vdwg.mxu0
      %593 = vmatpush.bf16.msra.mxu0 0
      %594 = vmatpush.bf16.msra.mxu0 0
      %595 = vmatpush.bf16.msra.mxu0 0
      %596 = vmatpush.bf16.msra.mxu0 0
      %597 = vmatpush.bf16.msra.mxu0 0
      %598 = vmatpush.bf16.msra.mxu0 0
      %599 = vmatpush.bf16.msra.mxu0 0
      %600 = vmatpush.bf16.msra.mxu0 %v528
      %601 = vmatmul.bf16.gmra.mxu0 %v549
      %v602 = vpop.f32.mrf.mxu0
      %v603 = vadd.f32 %v589, %v602
      %v604 = vpop.f32.mrf.mxu0
      %v605 = vadd.f32 %v591, %v604
      %606 = vdwg.mxu0
      %v607 = vmax.f32 %v575, 0.0
      %v608 = vmax.f32 %v603, 0.0
      %v609 = vmax.f32 %v577, 0.0
      %v610 = vmax.f32 %v605, 0.0
      %611 = vrot.lane.b32.xlu0 %v607, 17
      %v612 = vpop.permute.xlu0 %611
      %613 = vrot.lane.b32.xlu0 %v609, 17
      %v614 = vpop.permute.xlu0 %613
      %615 = vrot.lane.b32.xlu0 %v608, 17
      %v616 = vpop.permute.xlu0 %615
      %617 = vrot.lane.b32.xlu0 %v610, 17
      %v618 = vpop.permute.xlu0 %617
      %v619 = vsel %vm213, %v612, %v616
      %v620 = vsel %vm213, %v614, %v618
      %v621 = vsel %vm213, %v616, %v612
      %v622 = vsel %vm213, %v618, %v614
      %v623 = vld [vmem:[%s1] sm:$0xff]
      %v624 = vld [vmem:[%s1 + $0x8] sm:$0xff]
      %v625 = vld [vmem:[%s1 + $0x10] sm:$0xff]
      %v626 = vld [vmem:[%s1 + $0x18] sm:$0xff]
      %v627 = vmul.f32 %v621, %v623
      %v628 = vmul.f32 %v619, %v624
      %v629 = vmul.f32 %v622, %v625
      %v630 = vmul.f32 %v620, %v626
      %v631 = vpack.c.bf16 %v628, %v627
      %v632 = vpack.c.bf16 %v630, %v629
      %633 = vst [vmem:[#allocation2] sm:$0xff] %v631
      %634 = vst [vmem:[#allocation2 + $0x8] sm:$0xff] %v632
      %635 = vrot.lane.b32.xlu0 %v607, 16
      %v636 = vpop.permute.xlu0 %635
      %637 = vrot.lane.b32.xlu0 %v609, 16
      %v638 = vpop.permute.xlu0 %637
      %639 = vrot.lane.b32.xlu0 %v608, 16
      %v640 = vpop.permute.xlu0 %639
      %641 = vrot.lane.b32.xlu0 %v610, 16
      %v642 = vpop.permute.xlu0 %641
      %v643 = vsel %vm238, %v636, %v640
      %v644 = vsel %vm238, %v638, %v642
      %v645 = vsel %vm238, %v640, %v636
      %v646 = vsel %vm238, %v642, %v638
      %v647 = vld [vmem:[%s243] sm:$0xff]
      %v648 = vld [vmem:[%s243 + $0x8] sm:$0xff]
      %v649 = vld [vmem:[%s243 + $0x10] sm:$0xff]
      %v650 = vld [vmem:[%s243 + $0x18] sm:$0xff]
      %v651 = vmul.f32 %v645, %v647
      %v652 = vmul.f32 %v643, %v648
      %v653 = vmul.f32 %v646, %v649
      %v654 = vmul.f32 %v644, %v650
      %v655 = vpack.c.bf16 %v652, %v651
      %v656 = vpack.c.bf16 %v654, %v653
      %657 = vst [vmem:[#allocation2 + $0x10] sm:$0xff] %v655
      %658 = vst [vmem:[#allocation2 + $0x18] sm:$0xff] %v656
      %659 = vrot.lane.b32.xlu0 %v607, 15
      %v660 = vpop.permute.xlu0 %659
      %661 = vrot.lane.b32.xlu0 %v609, 15
      %v662 = vpop.permute.xlu0 %661
      %663 = vrot.lane.b32.xlu0 %v608, 15
      %v664 = vpop.permute.xlu0 %663
      %665 = vrot.lane.b32.xlu0 %v610, 15
      %v666 = vpop.permute.xlu0 %665
      %v667 = vsel %vm264, %v660, %v664
      %v668 = vsel %vm264, %v662, %v666
      %v669 = vsel %vm264, %v664, %v660
      %v670 = vsel %vm264, %v666, %v662
      %v671 = vld [vmem:[%s269] sm:$0xff]
      %v672 = vld [vmem:[%s269 + $0x8] sm:$0xff]
      %v673 = vld [vmem:[%s269 + $0x10] sm:$0xff]
      %v674 = vld [vmem:[%s269 + $0x18] sm:$0xff]
      %v675 = vmul.f32 %v669, %v671
      %v676 = vmul.f32 %v667, %v672
      %v677 = vmul.f32 %v670, %v673
      %v678 = vmul.f32 %v668, %v674
      %v679 = vpack.c.bf16 %v676, %v675
      %v680 = vpack.c.bf16 %v678, %v677
      %681 = vst [vmem:[#allocation2 + $0x20] sm:$0xff] %v679
      %682 = vst [vmem:[#allocation2 + $0x28] sm:$0xff] %v680
      %683 = vrot.lane.b32.xlu0 %v607, 1
      %v684 = vpop.permute.xlu0 %683
      %685 = vrot.lane.b32.xlu0 %v609, 1
      %v686 = vpop.permute.xlu0 %685
      %687 = vrot.lane.b32.xlu0 %v608, 1
      %v688 = vpop.permute.xlu0 %687
      %689 = vrot.lane.b32.xlu0 %v610, 1
      %v690 = vpop.permute.xlu0 %689
      %v691 = vsel %vm290, %v684, %v688
      %v692 = vsel %vm290, %v686, %v690
      %v693 = vsel %vm290, %v688, %v684
      %v694 = vsel %vm290, %v690, %v686
      %v695 = vld [vmem:[%s295] sm:$0xff]
      %v696 = vld [vmem:[%s295 + $0x8] sm:$0xff]
      %v697 = vld [vmem:[%s295 + $0x10] sm:$0xff]
      %v698 = vld [vmem:[%s295 + $0x18] sm:$0xff]
      %v699 = vmul.f32 %v693, %v695
      %v700 = vmul.f32 %v691, %v696
      %v701 = vmul.f32 %v694, %v697
      %v702 = vmul.f32 %v692, %v698
      %v703 = vpack.c.bf16 %v700, %v699
      %v704 = vpack.c.bf16 %v702, %v701
      %705 = vst [vmem:[#allocation2 + $0x30] sm:$0xff] %v703
      %706 = vst [vmem:[#allocation2 + $0x38] sm:$0xff] %v704
      %v707 = vpack.c.bf16 %v608, %v607
      %v708 = vpack.c.bf16 %v610, %v609
      %709 = vst [vmem:[#allocation2 + $0x40] sm:$0xff] %v707
      %710 = vst [vmem:[#allocation2 + $0x48] sm:$0xff] %v708
      %711 = vrot.lane.b32.xlu0 %v607, 127
      %v712 = vpop.permute.xlu0 %711
      %713 = vrot.lane.b32.xlu0 %v609, 127
      %v714 = vpop.permute.xlu0 %713
      %715 = vrot.lane.b32.xlu0 %v608, 127
      %v716 = vpop.permute.xlu0 %715
      %717 = vrot.lane.b32.xlu0 %v610, 127
      %v718 = vpop.permute.xlu0 %717
      %v719 = vsel %vm320, %v712, %v716
      %v720 = vsel %vm320, %v714, %v718
      %v721 = vsel %vm320, %v716, %v712
      %v722 = vsel %vm320, %v718, %v714
      %v723 = vld [vmem:[%s325] sm:$0xff]
      %v724 = vld [vmem:[%s325 + $0x8] sm:$0xff]
      %v725 = vld [vmem:[%s325 + $0x10] sm:$0xff]
      %v726 = vld [vmem:[%s325 + $0x18] sm:$0xff]
      %v727 = vmul.f32 %v719, %v723
      %v728 = vmul.f32 %v721, %v724
      %v729 = vmul.f32 %v720, %v725
      %v730 = vmul.f32 %v722, %v726
      %v731 = vpack.c.bf16 %v728, %v727
      %v732 = vpack.c.bf16 %v730, %v729
      %733 = vst [vmem:[#allocation2 + $0x50] sm:$0xff] %v731
      %734 = vst [vmem:[#allocation2 + $0x58] sm:$0xff] %v732
      %735 = vrot.lane.b32.xlu0 %v607, 113
      %v736 = vpop.permute.xlu0 %735
      %737 = vrot.lane.b32.xlu0 %v609, 113
      %v738 = vpop.permute.xlu0 %737
      %739 = vrot.lane.b32.xlu0 %v608, 113
      %v740 = vpop.permute.xlu0 %739
      %741 = vrot.lane.b32.xlu0 %v610, 113
      %v742 = vpop.permute.xlu0 %741
      %v743 = vsel %vm346, %v736, %v740
      %v744 = vsel %vm346, %v738, %v742
      %v745 = vsel %vm346, %v740, %v736
      %v746 = vsel %vm346, %v742, %v738
      %v747 = vld [vmem:[%s351] sm:$0xff]
      %v748 = vld [vmem:[%s351 + $0x8] sm:$0xff]
      %v749 = vld [vmem:[%s351 + $0x10] sm:$0xff]
      %v750 = vld [vmem:[%s351 + $0x18] sm:$0xff]
      %v751 = vmul.f32 %v743, %v747
      %v752 = vmul.f32 %v745, %v748
      %v753 = vmul.f32 %v744, %v749
      %v754 = vmul.f32 %v746, %v750
      %v755 = vpack.c.bf16 %v752, %v751
      %v756 = vpack.c.bf16 %v754, %v753
      %757 = vst [vmem:[#allocation2 + $0x60] sm:$0xff] %v755
      %758 = vst [vmem:[#allocation2 + $0x68] sm:$0xff] %v756
      %759 = vrot.lane.b32.xlu0 %v607, 112
      %v760 = vpop.permute.xlu0 %759
      %761 = vrot.lane.b32.xlu0 %v609, 112
      %v762 = vpop.permute.xlu0 %761
      %763 = vrot.lane.b32.xlu0 %v608, 112
      %v764 = vpop.permute.xlu0 %763
      %765 = vrot.lane.b32.xlu0 %v610, 112
      %v766 = vpop.permute.xlu0 %765
      %v767 = vsel %vm372, %v760, %v764
      %v768 = vsel %vm372, %v762, %v766
      %v769 = vsel %vm372, %v764, %v760
      %v770 = vsel %vm372, %v766, %v762
      %v771 = vld [vmem:[%s377] sm:$0xff]
      %v772 = vld [vmem:[%s377 + $0x8] sm:$0xff]
      %v773 = vld [vmem:[%s377 + $0x10] sm:$0xff]
      %v774 = vld [vmem:[%s377 + $0x18] sm:$0xff]
      %v775 = vmul.f32 %v767, %v771
      %v776 = vmul.f32 %v769, %v772
      %v777 = vmul.f32 %v768, %v773
      %v778 = vmul.f32 %v770, %v774
      %v779 = vpack.c.bf16 %v776, %v775
      %v780 = vpack.c.bf16 %v778, %v777
      %781 = vst [vmem:[#allocation2 + $0x70] sm:$0xff] %v779
      %782 = vst [vmem:[#allocation2 + $0x78] sm:$0xff] %v780
      %783 = vrot.lane.b32.xlu0 %v607, 111
      %v784 = vpop.permute.xlu0 %783
      %785 = vrot.lane.b32.xlu0 %v609, 111
      %v786 = vpop.permute.xlu0 %785
      %787 = vrot.lane.b32.xlu0 %v608, 111
      %v788 = vpop.permute.xlu0 %787
      %789 = vrot.lane.b32.xlu0 %v610, 111
      %v790 = vpop.permute.xlu0 %789
      %v791 = vsel %vm398, %v784, %v788
      %v792 = vsel %vm398, %v786, %v790
      %v793 = vsel %vm398, %v788, %v784
      %v794 = vsel %vm398, %v790, %v786
      %v795 = vld [vmem:[%s403] sm:$0xff]
      %v796 = vld [vmem:[%s403 + $0x8] sm:$0xff]
      %v797 = vld [vmem:[%s403 + $0x10] sm:$0xff]
      %v798 = vld [vmem:[%s403 + $0x18] sm:$0xff]
      %v799 = vmul.f32 %v791, %v795
      %v800 = vmul.f32 %v793, %v796
      %v801 = vmul.f32 %v792, %v797
      %v802 = vmul.f32 %v794, %v798
      %v803 = vpack.c.bf16 %v800, %v799
      %v804 = vpack.c.bf16 %v802, %v801
      %805 = vst [vmem:[#allocation2 + $0x80] sm:$0xff] %v803
      %806 = vst [vmem:[#allocation2 + $0x88] sm:$0xff] %v804
      %s807 = scalar_lea.vmem %s2, 16
      %v808 = vld [vmem:[%s807] sm:$0xff]
      %v809 = vld [vmem:[%s807 + $0x8] sm:$0xff]
      %v810 = vld [vmem:[#allocation2] sm:$0xff]
      %v811 = vld [vmem:[#allocation2 + $0x8] sm:$0xff]
      %v812 = vld [vmem:[#allocation2 + $0x10] sm:$0xff]
      %v813 = vld [vmem:[#allocation2 + $0x18] sm:$0xff]
      %v814 = vld [vmem:[#allocation2 + $0x20] sm:$0xff]
      %v815 = vld [vmem:[#allocation2 + $0x28] sm:$0xff]
      %v816 = vld [vmem:[#allocation2 + $0x30] sm:$0xff]
      %v817 = vld [vmem:[#allocation2 + $0x38] sm:$0xff]
      %v818 = vld [vmem:[#allocation2 + $0x40] sm:$0xff]
      %v819 = vld [vmem:[#allocation2 + $0x48] sm:$0xff]
      %v820 = vld [vmem:[#allocation2 + $0x50] sm:$0xff]
      %v821 = vld [vmem:[#allocation2 + $0x58] sm:$0xff]
      %v822 = vld [vmem:[#allocation2 + $0x60] sm:$0xff]
      %v823 = vld [vmem:[#allocation2 + $0x68] sm:$0xff]
      %v824 = vld [vmem:[#allocation2 + $0x70] sm:$0xff]
      %v825 = vld [vmem:[#allocation2 + $0x78] sm:$0xff]
      %v826 = vld [vmem:[#allocation2 + $0x80] sm:$0xff]
      %v827 = vld [vmem:[#allocation2 + $0x88] sm:$0xff]
      %s828 = scalar_lea.vmem %s3, 16
      %v829 = vld [vmem:[%s828] sm:$0xff]
      %v830 = vld [vmem:[%s828 + $0x8] sm:$0xff]
      %832 = vset.pattern.permute.xlu0 0
      %833 = vperm.xlu0 %832, %v829
      %v834 = vpop.permute.xlu0 %833
      %837 = vset.pattern.permute.xlu0 0
      %838 = vperm.xlu0 %837, %v830
      %v839 = vpop.permute.xlu0 %838
      %v843 = vunpack.c.l.b16 %v808
      %v844 = vunpack.c.h.b16 %v808
      %v845 = vunpack.c.l.b16 %v809
      %v846 = vunpack.c.h.b16 %v809
      %v847 = vpack.c.b16 %v845, %v843
      %v848 = vpack.c.b16 %v846, %v844
      %v868 = vunpack.c.l.b16 %v810
      %v869 = vunpack.c.h.b16 %v810
      %v870 = vunpack.c.l.b16 %v811
      %v871 = vunpack.c.h.b16 %v811
      %v872 = vunpack.c.l.b16 %v812
      %v873 = vunpack.c.h.b16 %v812
      %v874 = vunpack.c.l.b16 %v813
      %v875 = vunpack.c.h.b16 %v813
      %v876 = vunpack.c.l.b16 %v814
      %v877 = vunpack.c.h.b16 %v814
      %v878 = vunpack.c.l.b16 %v815
      %v879 = vunpack.c.h.b16 %v815
      %v880 = vunpack.c.l.b16 %v816
      %v881 = vunpack.c.h.b16 %v816
      %v882 = vunpack.c.l.b16 %v817
      %v883 = vunpack.c.h.b16 %v817
      %v884 = vunpack.c.l.b16 %v818
      %v885 = vunpack.c.h.b16 %v818
      %v886 = vunpack.c.l.b16 %v819
      %v887 = vunpack.c.h.b16 %v819
      %v888 = vunpack.c.l.b16 %v820
      %v889 = vunpack.c.h.b16 %v820
      %v890 = vunpack.c.l.b16 %v821
      %v891 = vunpack.c.h.b16 %v821
      %v892 = vunpack.c.l.b16 %v822
      %v893 = vunpack.c.h.b16 %v822
      %v894 = vunpack.c.l.b16 %v823
      %v895 = vunpack.c.h.b16 %v823
      %v896 = vunpack.c.l.b16 %v824
      %v897 = vunpack.c.h.b16 %v824
      %v898 = vunpack.c.l.b16 %v825
      %v899 = vunpack.c.h.b16 %v825
      %v900 = vunpack.c.l.b16 %v826
      %v901 = vunpack.c.h.b16 %v826
      %v902 = vunpack.c.l.b16 %v827
      %v903 = vunpack.c.h.b16 %v827
      %v904 = vpack.c.b16 %v870, %v868
      %v905 = vpack.c.b16 %v871, %v869
      %v906 = vpack.c.b16 %v874, %v872
      %v907 = vpack.c.b16 %v875, %v873
      %v908 = vpack.c.b16 %v878, %v876
      %v909 = vpack.c.b16 %v879, %v877
      %v910 = vpack.c.b16 %v882, %v880
      %v911 = vpack.c.b16 %v883, %v881
      %v912 = vpack.c.b16 %v886, %v884
      %v913 = vpack.c.b16 %v887, %v885
      %v914 = vpack.c.b16 %v890, %v888
      %v915 = vpack.c.b16 %v891, %v889
      %v916 = vpack.c.b16 %v894, %v892
      %v917 = vpack.c.b16 %v895, %v893
      %v918 = vpack.c.b16 %v898, %v896
      %v919 = vpack.c.b16 %v899, %v897
      %v920 = vpack.c.b16 %v902, %v900
      %v921 = vpack.c.b16 %v903, %v901
      %v941 = vsel %vm547, %v848, 0
      %943 = vmatpush.bf16.msra.mxu0 %v918
      %944 = vmatpush.bf16.msra.mxu0 %v916
      %945 = vmatpush.bf16.msra.mxu0 %v914
      %946 = vmatpush.bf16.msra.mxu0 %v912
      %947 = vmatpush.bf16.msra.mxu0 %v910
      %948 = vmatpush.bf16.msra.mxu0 %v908
      %949 = vmatpush.bf16.msra.mxu0 %v906
      %950 = vmatpush.bf16.msra.mxu0 %v904
      %951 = vmatmul.bf16.gmra.mxu0 %v847
      %v952 = vpop.f32.mrf.mxu0
      %v953 = vadd.f32 %v834, %v952
      %v954 = vpop.f32.mrf.mxu0
      %v955 = vadd.f32 %v839, %v954
      %956 = vdwg.mxu0
      %957 = vmatpush.bf16.msra.mxu0 0
      %958 = vmatpush.bf16.msra.mxu0 0
      %959 = vmatpush.bf16.msra.mxu0 0
      %960 = vmatpush.bf16.msra.mxu0 0
      %961 = vmatpush.bf16.msra.mxu0 0
      %962 = vmatpush.bf16.msra.mxu0 0
      %963 = vmatpush.bf16.msra.mxu0 0
      %964 = vmatpush.bf16.msra.mxu0 %v920
      %965 = vmatmul.bf16.gmra.mxu0 %v941
      %v966 = vpop.f32.mrf.mxu0
      %v967 = vadd.f32 %v953, %v966
      %v968 = vpop.f32.mrf.mxu0
      %v969 = vadd.f32 %v955, %v968
      %970 = vdwg.mxu0
      %971 = vmatpush.bf16.msra.mxu0 %v919
      %972 = vmatpush.bf16.msra.mxu0 %v917
      %973 = vmatpush.bf16.msra.mxu0 %v915
      %974 = vmatpush.bf16.msra.mxu0 %v913
      %975 = vmatpush.bf16.msra.mxu0 %v911
      %976 = vmatpush.bf16.msra.mxu0 %v909
      %977 = vmatpush.bf16.msra.mxu0 %v907
      %978 = vmatpush.bf16.msra.mxu0 %v905
      %979 = vmatmul.bf16.gmra.mxu0 %v847
      %v980 = vpop.f32.mrf.mxu0
      %v981 = vadd.f32 %v834, %v980
      %v982 = vpop.f32.mrf.mxu0
      %v983 = vadd.f32 %v839, %v982
      %984 = vdwg.mxu0
      %985 = vmatpush.bf16.msra.mxu0 0
      %986 = vmatpush.bf16.msra.mxu0 0
      %987 = vmatpush.bf16.msra.mxu0 0
      %988 = vmatpush.bf16.msra.mxu0 0
      %989 = vmatpush.bf16.msra.mxu0 0
      %990 = vmatpush.bf16.msra.mxu0 0
      %991 = vmatpush.bf16.msra.mxu0 0
      %992 = vmatpush.bf16.msra.mxu0 %v921
      %993 = vmatmul.bf16.gmra.mxu0 %v941
      %v994 = vpop.f32.mrf.mxu0
      %v995 = vadd.f32 %v981, %v994
      %v996 = vpop.f32.mrf.mxu0
      %v997 = vadd.f32 %v983, %v996
      %998 = vdwg.mxu0
      %v999 = vadd.f32 %v967, %v199
      %v1000 = vadd.f32 %v995, %v200
      %v1001 = vadd.f32 %v969, %v201
      %v1002 = vadd.f32 %v997, %v202
      %v1003 = vmax.f32 %v999, 0.0
      %v1004 = vmax.f32 %v1000, 0.0
      %v1005 = vmax.f32 %v1001, 0.0
      %v1006 = vmax.f32 %v1002, 0.0
      %1007 = vrot.lane.b32.xlu0 %v1003, 17
      %v1008 = vpop.permute.xlu0 %1007
      %1009 = vrot.lane.b32.xlu0 %v1005, 17
      %v1010 = vpop.permute.xlu0 %1009
      %1011 = vrot.lane.b32.xlu0 %v1004, 17
      %v1012 = vpop.permute.xlu0 %1011
      %1013 = vrot.lane.b32.xlu0 %v1006, 17
      %v1014 = vpop.permute.xlu0 %1013
      %v1015 = vsel %vm213, %v1008, %v1012
      %v1016 = vsel %vm213, %v1010, %v1014
      %v1017 = vsel %vm213, %v1012, %v1008
      %v1018 = vsel %vm213, %v1014, %v1010
      %v1019 = vld [vmem:[%s1] sm:$0xff]
      %v1020 = vld [vmem:[%s1 + $0x8] sm:$0xff]
      %v1021 = vld [vmem:[%s1 + $0x10] sm:$0xff]
      %v1022 = vld [vmem:[%s1 + $0x18] sm:$0xff]
      %v1023 = vmul.f32 %v1017, %v1019
      %v1024 = vmul.f32 %v1015, %v1020
      %v1025 = vmul.f32 %v1018, %v1021
      %v1026 = vmul.f32 %v1016, %v1022
      %v1027 = vpack.c.bf16 %v1024, %v1023
      %v1028 = vpack.c.bf16 %v1026, %v1025
      %1029 = vst [vmem:[#allocation2] sm:$0xff] %v1027
      %1030 = vst [vmem:[#allocation2 + $0x8] sm:$0xff] %v1028
      %1031 = vrot.lane.b32.xlu0 %v1003, 16
      %v1032 = vpop.permute.xlu0 %1031
      %1033 = vrot.lane.b32.xlu0 %v1005, 16
      %v1034 = vpop.permute.xlu0 %1033
      %1035 = vrot.lane.b32.xlu0 %v1004, 16
      %v1036 = vpop.permute.xlu0 %1035
      %1037 = vrot.lane.b32.xlu0 %v1006, 16
      %v1038 = vpop.permute.xlu0 %1037
      %v1039 = vsel %vm238, %v1032, %v1036
      %v1040 = vsel %vm238, %v1034, %v1038
      %v1041 = vsel %vm238, %v1036, %v1032
      %v1042 = vsel %vm238, %v1038, %v1034
      %v1043 = vld [vmem:[%s243] sm:$0xff]
      %v1044 = vld [vmem:[%s243 + $0x8] sm:$0xff]
      %v1045 = vld [vmem:[%s243 + $0x10] sm:$0xff]
      %v1046 = vld [vmem:[%s243 + $0x18] sm:$0xff]
      %v1047 = vmul.f32 %v1041, %v1043
      %v1048 = vmul.f32 %v1039, %v1044
      %v1049 = vmul.f32 %v1042, %v1045
      %v1050 = vmul.f32 %v1040, %v1046
      %v1051 = vpack.c.bf16 %v1048, %v1047
      %v1052 = vpack.c.bf16 %v1050, %v1049
      %1053 = vst [vmem:[#allocation2 + $0x10] sm:$0xff] %v1051
      %1054 = vst [vmem:[#allocation2 + $0x18] sm:$0xff] %v1052
      %1055 = vrot.lane.b32.xlu0 %v1003, 15
      %v1056 = vpop.permute.xlu0 %1055
      %1057 = vrot.lane.b32.xlu0 %v1005, 15
      %v1058 = vpop.permute.xlu0 %1057
      %1059 = vrot.lane.b32.xlu0 %v1004, 15
      %v1060 = vpop.permute.xlu0 %1059
      %1061 = vrot.lane.b32.xlu0 %v1006, 15
      %v1062 = vpop.permute.xlu0 %1061
      %v1063 = vsel %vm264, %v1056, %v1060
      %v1064 = vsel %vm264, %v1058, %v1062
      %v1065 = vsel %vm264, %v1060, %v1056
      %v1066 = vsel %vm264, %v1062, %v1058
      %v1067 = vld [vmem:[%s269] sm:$0xff]
      %v1068 = vld [vmem:[%s269 + $0x8] sm:$0xff]
      %v1069 = vld [vmem:[%s269 + $0x10] sm:$0xff]
      %v1070 = vld [vmem:[%s269 + $0x18] sm:$0xff]
      %v1071 = vmul.f32 %v1065, %v1067
      %v1072 = vmul.f32 %v1063, %v1068
      %v1073 = vmul.f32 %v1066, %v1069
      %v1074 = vmul.f32 %v1064, %v1070
      %v1075 = vpack.c.bf16 %v1072, %v1071
      %v1076 = vpack.c.bf16 %v1074, %v1073
      %1077 = vst [vmem:[#allocation2 + $0x20] sm:$0xff] %v1075
      %1078 = vst [vmem:[#allocation2 + $0x28] sm:$0xff] %v1076
      %1079 = vrot.lane.b32.xlu0 %v1003, 1
      %v1080 = vpop.permute.xlu0 %1079
      %1081 = vrot.lane.b32.xlu0 %v1005, 1
      %v1082 = vpop.permute.xlu0 %1081
      %1083 = vrot.lane.b32.xlu0 %v1004, 1
      %v1084 = vpop.permute.xlu0 %1083
      %1085 = vrot.lane.b32.xlu0 %v1006, 1
      %v1086 = vpop.permute.xlu0 %1085
      %v1087 = vsel %vm290, %v1080, %v1084
      %v1088 = vsel %vm290, %v1082, %v1086
      %v1089 = vsel %vm290, %v1084, %v1080
      %v1090 = vsel %vm290, %v1086, %v1082
      %v1091 = vld [vmem:[%s295] sm:$0xff]
      %v1092 = vld [vmem:[%s295 + $0x8] sm:$0xff]
      %v1093 = vld [vmem:[%s295 + $0x10] sm:$0xff]
      %v1094 = vld [vmem:[%s295 + $0x18] sm:$0xff]
      %v1095 = vmul.f32 %v1089, %v1091
      %v1096 = vmul.f32 %v1087, %v1092
      %v1097 = vmul.f32 %v1090, %v1093
      %v1098 = vmul.f32 %v1088, %v1094
      %v1099 = vpack.c.bf16 %v1096, %v1095
      %v1100 = vpack.c.bf16 %v1098, %v1097
      %1101 = vst [vmem:[#allocation2 + $0x30] sm:$0xff] %v1099
      %1102 = vst [vmem:[#allocation2 + $0x38] sm:$0xff] %v1100
      %v1103 = vpack.c.bf16 %v1004, %v1003
      %v1104 = vpack.c.bf16 %v1006, %v1005
      %1105 = vst [vmem:[#allocation2 + $0x40] sm:$0xff] %v1103
      %1106 = vst [vmem:[#allocation2 + $0x48] sm:$0xff] %v1104
      %1107 = vrot.lane.b32.xlu0 %v1003, 127
      %v1108 = vpop.permute.xlu0 %1107
      %1109 = vrot.lane.b32.xlu0 %v1005, 127
      %v1110 = vpop.permute.xlu0 %1109
      %1111 = vrot.lane.b32.xlu0 %v1004, 127
      %v1112 = vpop.permute.xlu0 %1111
      %1113 = vrot.lane.b32.xlu0 %v1006, 127
      %v1114 = vpop.permute.xlu0 %1113
      %v1115 = vsel %vm320, %v1108, %v1112
      %v1116 = vsel %vm320, %v1110, %v1114
      %v1117 = vsel %vm320, %v1112, %v1108
      %v1118 = vsel %vm320, %v1114, %v1110
      %v1119 = vld [vmem:[%s325] sm:$0xff]
      %v1120 = vld [vmem:[%s325 + $0x8] sm:$0xff]
      %v1121 = vld [vmem:[%s325 + $0x10] sm:$0xff]
      %v1122 = vld [vmem:[%s325 + $0x18] sm:$0xff]
      %v1123 = vmul.f32 %v1115, %v1119
      %v1124 = vmul.f32 %v1117, %v1120
      %v1125 = vmul.f32 %v1116, %v1121
      %v1126 = vmul.f32 %v1118, %v1122
      %v1127 = vpack.c.bf16 %v1124, %v1123
      %v1128 = vpack.c.bf16 %v1126, %v1125
      %1129 = vst [vmem:[#allocation2 + $0x50] sm:$0xff] %v1127
      %1130 = vst [vmem:[#allocation2 + $0x58] sm:$0xff] %v1128
      %1131 = vrot.lane.b32.xlu0 %v1003, 113
      %v1132 = vpop.permute.xlu0 %1131
      %1133 = vrot.lane.b32.xlu0 %v1005, 113
      %v1134 = vpop.permute.xlu0 %1133
      %1135 = vrot.lane.b32.xlu0 %v1004, 113
      %v1136 = vpop.permute.xlu0 %1135
      %1137 = vrot.lane.b32.xlu0 %v1006, 113
      %v1138 = vpop.permute.xlu0 %1137
      %v1139 = vsel %vm346, %v1132, %v1136
      %v1140 = vsel %vm346, %v1134, %v1138
      %v1141 = vsel %vm346, %v1136, %v1132
      %v1142 = vsel %vm346, %v1138, %v1134
      %v1143 = vld [vmem:[%s351] sm:$0xff]
      %v1144 = vld [vmem:[%s351 + $0x8] sm:$0xff]
      %v1145 = vld [vmem:[%s351 + $0x10] sm:$0xff]
      %v1146 = vld [vmem:[%s351 + $0x18] sm:$0xff]
      %v1147 = vmul.f32 %v1139, %v1143
      %v1148 = vmul.f32 %v1141, %v1144
      %v1149 = vmul.f32 %v1140, %v1145
      %v1150 = vmul.f32 %v1142, %v1146
      %v1151 = vpack.c.bf16 %v1148, %v1147
      %v1152 = vpack.c.bf16 %v1150, %v1149
      %1153 = vst [vmem:[#allocation2 + $0x60] sm:$0xff] %v1151
      %1154 = vst [vmem:[#allocation2 + $0x68] sm:$0xff] %v1152
      %1155 = vrot.lane.b32.xlu0 %v1003, 112
      %v1156 = vpop.permute.xlu0 %1155
      %1157 = vrot.lane.b32.xlu0 %v1005, 112
      %v1158 = vpop.permute.xlu0 %1157
      %1159 = vrot.lane.b32.xlu0 %v1004, 112
      %v1160 = vpop.permute.xlu0 %1159
      %1161 = vrot.lane.b32.xlu0 %v1006, 112
      %v1162 = vpop.permute.xlu0 %1161
      %v1163 = vsel %vm372, %v1156, %v1160
      %v1164 = vsel %vm372, %v1158, %v1162
      %v1165 = vsel %vm372, %v1160, %v1156
      %v1166 = vsel %vm372, %v1162, %v1158
      %v1167 = vld [vmem:[%s377] sm:$0xff]
      %v1168 = vld [vmem:[%s377 + $0x8] sm:$0xff]
      %v1169 = vld [vmem:[%s377 + $0x10] sm:$0xff]
      %v1170 = vld [vmem:[%s377 + $0x18] sm:$0xff]
      %v1171 = vmul.f32 %v1163, %v1167
      %v1172 = vmul.f32 %v1165, %v1168
      %v1173 = vmul.f32 %v1164, %v1169
      %v1174 = vmul.f32 %v1166, %v1170
      %v1175 = vpack.c.bf16 %v1172, %v1171
      %v1176 = vpack.c.bf16 %v1174, %v1173
      %1177 = vst [vmem:[#allocation2 + $0x70] sm:$0xff] %v1175
      %1178 = vst [vmem:[#allocation2 + $0x78] sm:$0xff] %v1176
      %1179 = vrot.lane.b32.xlu0 %v1003, 111
      %v1180 = vpop.permute.xlu0 %1179
      %1181 = vrot.lane.b32.xlu0 %v1005, 111
      %v1182 = vpop.permute.xlu0 %1181
      %1183 = vrot.lane.b32.xlu0 %v1004, 111
      %v1184 = vpop.permute.xlu0 %1183
      %1185 = vrot.lane.b32.xlu0 %v1006, 111
      %v1186 = vpop.permute.xlu0 %1185
      %v1187 = vsel %vm398, %v1180, %v1184
      %v1188 = vsel %vm398, %v1182, %v1186
      %v1189 = vsel %vm398, %v1184, %v1180
      %v1190 = vsel %vm398, %v1186, %v1182
      %v1191 = vld [vmem:[%s403] sm:$0xff]
      %v1192 = vld [vmem:[%s403 + $0x8] sm:$0xff]
      %v1193 = vld [vmem:[%s403 + $0x10] sm:$0xff]
      %v1194 = vld [vmem:[%s403 + $0x18] sm:$0xff]
      %v1195 = vmul.f32 %v1187, %v1191
      %v1196 = vmul.f32 %v1189, %v1192
      %v1197 = vmul.f32 %v1188, %v1193
      %v1198 = vmul.f32 %v1190, %v1194
      %v1199 = vpack.c.bf16 %v1196, %v1195
      %v1200 = vpack.c.bf16 %v1198, %v1197
      %1201 = vst [vmem:[#allocation2 + $0x80] sm:$0xff] %v1199
      %1202 = vst [vmem:[#allocation2 + $0x88] sm:$0xff] %v1200
      %s1203 = scalar_lea.vmem %s2, 32
      %v1204 = vld [vmem:[%s1203] sm:$0xff]
      %v1205 = vld [vmem:[%s1203 + $0x8] sm:$0xff]
      %v1206 = vld [vmem:[#allocation2] sm:$0xff]
      %v1207 = vld [vmem:[#allocation2 + $0x8] sm:$0xff]
      %v1208 = vld [vmem:[#allocation2 + $0x10] sm:$0xff]
      %v1209 = vld [vmem:[#allocation2 + $0x18] sm:$0xff]
      %v1210 = vld [vmem:[#allocation2 + $0x20] sm:$0xff]
      %v1211 = vld [vmem:[#allocation2 + $0x28] sm:$0xff]
      %v1212 = vld [vmem:[#allocation2 + $0x30] sm:$0xff]
      %v1213 = vld [vmem:[#allocation2 + $0x38] sm:$0xff]
      %v1214 = vld [vmem:[#allocation2 + $0x40] sm:$0xff]
      %v1215 = vld [vmem:[#allocation2 + $0x48] sm:$0xff]
      %v1216 = vld [vmem:[#allocation2 + $0x50] sm:$0xff]
      %v1217 = vld [vmem:[#allocation2 + $0x58] sm:$0xff]
      %v1218 = vld [vmem:[#allocation2 + $0x60] sm:$0xff]
      %v1219 = vld [vmem:[#allocation2 + $0x68] sm:$0xff]
      %v1220 = vld [vmem:[#allocation2 + $0x70] sm:$0xff]
      %v1221 = vld [vmem:[#allocation2 + $0x78] sm:$0xff]
      %v1222 = vld [vmem:[#allocation2 + $0x80] sm:$0xff]
      %v1223 = vld [vmem:[#allocation2 + $0x88] sm:$0xff]
      %s1224 = scalar_lea.vmem %s3, 32
      %v1225 = vld [vmem:[%s1224] sm:$0xff]
      %v1226 = vld [vmem:[%s1224 + $0x8] sm:$0xff]
      %1228 = vset.pattern.permute.xlu0 0
      %1229 = vperm.xlu0 %1228, %v1225
      %v1230 = vpop.permute.xlu0 %1229
      %1233 = vset.pattern.permute.xlu0 0
      %1234 = vperm.xlu0 %1233, %v1226
      %v1235 = vpop.permute.xlu0 %1234
      %v1239 = vunpack.c.l.b16 %v1204
      %v1240 = vunpack.c.h.b16 %v1204
      %v1241 = vunpack.c.l.b16 %v1205
      %v1242 = vunpack.c.h.b16 %v1205
      %v1243 = vpack.c.b16 %v1241, %v1239
      %v1244 = vpack.c.b16 %v1242, %v1240
      %v1264 = vunpack.c.l.b16 %v1206
      %v1265 = vunpack.c.h.b16 %v1206
      %v1266 = vunpack.c.l.b16 %v1207
      %v1267 = vunpack.c.h.b16 %v1207
      %v1268 = vunpack.c.l.b16 %v1208
      %v1269 = vunpack.c.h.b16 %v1208
      %v1270 = vunpack.c.l.b16 %v1209
      %v1271 = vunpack.c.h.b16 %v1209
      %v1272 = vunpack.c.l.b16 %v1210
      %v1273 = vunpack.c.h.b16 %v1210
      %v1274 = vunpack.c.l.b16 %v1211
      %v1275 = vunpack.c.h.b16 %v1211
      %v1276 = vunpack.c.l.b16 %v1212
      %v1277 = vunpack.c.h.b16 %v1212
      %v1278 = vunpack.c.l.b16 %v1213
      %v1279 = vunpack.c.h.b16 %v1213
      %v1280 = vunpack.c.l.b16 %v1214
      %v1281 = vunpack.c.h.b16 %v1214
      %v1282 = vunpack.c.l.b16 %v1215
      %v1283 = vunpack.c.h.b16 %v1215
      %v1284 = vunpack.c.l.b16 %v1216
      %v1285 = vunpack.c.h.b16 %v1216
      %v1286 = vunpack.c.l.b16 %v1217
      %v1287 = vunpack.c.h.b16 %v1217
      %v1288 = vunpack.c.l.b16 %v1218
      %v1289 = vunpack.c.h.b16 %v1218
      %v1290 = vunpack.c.l.b16 %v1219
      %v1291 = vunpack.c.h.b16 %v1219
      %v1292 = vunpack.c.l.b16 %v1220
      %v1293 = vunpack.c.h.b16 %v1220
      %v1294 = vunpack.c.l.b16 %v1221
      %v1295 = vunpack.c.h.b16 %v1221
      %v1296 = vunpack.c.l.b16 %v1222
      %v1297 = vunpack.c.h.b16 %v1222
      %v1298 = vunpack.c.l.b16 %v1223
      %v1299 = vunpack.c.h.b16 %v1223
      %v1300 = vpack.c.b16 %v1266, %v1264
      %v1301 = vpack.c.b16 %v1267, %v1265
      %v1302 = vpack.c.b16 %v1270, %v1268
      %v1303 = vpack.c.b16 %v1271, %v1269
      %v1304 = vpack.c.b16 %v1274, %v1272
      %v1305 = vpack.c.b16 %v1275, %v1273
      %v1306 = vpack.c.b16 %v1278, %v1276
      %v1307 = vpack.c.b16 %v1279, %v1277
      %v1308 = vpack.c.b16 %v1282, %v1280
      %v1309 = vpack.c.b16 %v1283, %v1281
      %v1310 = vpack.c.b16 %v1286, %v1284
      %v1311 = vpack.c.b16 %v1287, %v1285
      %v1312 = vpack.c.b16 %v1290, %v1288
      %v1313 = vpack.c.b16 %v1291, %v1289
      %v1314 = vpack.c.b16 %v1294, %v1292
      %v1315 = vpack.c.b16 %v1295, %v1293
      %v1316 = vpack.c.b16 %v1298, %v1296
      %v1317 = vpack.c.b16 %v1299, %v1297
      %v1337 = vsel %vm547, %v1244, 0
      %1339 = vmatpush.bf16.msra.mxu0 %v1314
      %1340 = vmatpush.bf16.msra.mxu0 %v1312
      %1341 = vmatpush.bf16.msra.mxu0 %v1310
      %1342 = vmatpush.bf16.msra.mxu0 %v1308
      %1343 = vmatpush.bf16.msra.mxu0 %v1306
      %1344 = vmatpush.bf16.msra.mxu0 %v1304
      %1345 = vmatpush.bf16.msra.mxu0 %v1302
      %1346 = vmatpush.bf16.msra.mxu0 %v1300
      %1347 = vmatmul.bf16.gmra.mxu0 %v1243
      %v1348 = vpop.f32.mrf.mxu0
      %v1349 = vadd.f32 %v1230, %v1348
      %v1350 = vpop.f32.mrf.mxu0
      %v1351 = vadd.f32 %v1235, %v1350
      %1352 = vdwg.mxu0
      %1353 = vmatpush.bf16.msra.mxu0 0
      %1354 = vmatpush.bf16.msra.mxu0 0
      %1355 = vmatpush.bf16.msra.mxu0 0
      %1356 = vmatpush.bf16.msra.mxu0 0
      %1357 = vmatpush.bf16.msra.mxu0 0
      %1358 = vmatpush.bf16.msra.mxu0 0
      %1359 = vmatpush.bf16.msra.mxu0 0
      %1360 = vmatpush.bf16.msra.mxu0 %v1316
      %1361 = vmatmul.bf16.gmra.mxu0 %v1337
      %v1362 = vpop.f32.mrf.mxu0
      %v1363 = vadd.f32 %v1349, %v1362
      %v1364 = vpop.f32.mrf.mxu0
      %v1365 = vadd.f32 %v1351, %v1364
      %1366 = vdwg.mxu0
      %1367 = vmatpush.bf16.msra.mxu0 %v1315
      %1368 = vmatpush.bf16.msra.mxu0 %v1313
      %1369 = vmatpush.bf16.msra.mxu0 %v1311
      %1370 = vmatpush.bf16.msra.mxu0 %v1309
      %1371 = vmatpush.bf16.msra.mxu0 %v1307
      %1372 = vmatpush.bf16.msra.mxu0 %v1305
      %1373 = vmatpush.bf16.msra.mxu0 %v1303
      %1374 = vmatpush.bf16.msra.mxu0 %v1301
      %1375 = vmatmul.bf16.gmra.mxu0 %v1243
      %v1376 = vpop.f32.mrf.mxu0
      %v1377 = vadd.f32 %v1230, %v1376
      %v1378 = vpop.f32.mrf.mxu0
      %v1379 = vadd.f32 %v1235, %v1378
      %1380 = vdwg.mxu0
      %1381 = vmatpush.bf16.msra.mxu0 0
      %1382 = vmatpush.bf16.msra.mxu0 0
      %1383 = vmatpush.bf16.msra.mxu0 0
      %1384 = vmatpush.bf16.msra.mxu0 0
      %1385 = vmatpush.bf16.msra.mxu0 0
      %1386 = vmatpush.bf16.msra.mxu0 0
      %1387 = vmatpush.bf16.msra.mxu0 0
      %1388 = vmatpush.bf16.msra.mxu0 %v1317
      %1389 = vmatmul.bf16.gmra.mxu0 %v1337
      %v1390 = vpop.f32.mrf.mxu0
      %v1391 = vadd.f32 %v1377, %v1390
      %v1392 = vpop.f32.mrf.mxu0
      %v1393 = vadd.f32 %v1379, %v1392
      %1394 = vdwg.mxu0
      %v1395 = vmax.f32 %v1363, 0.0
      %v1396 = vmax.f32 %v1391, 0.0
      %v1397 = vmax.f32 %v1365, 0.0
      %v1398 = vmax.f32 %v1393, 0.0
      %1399 = vrot.lane.b32.xlu0 %v1395, 17
      %v1400 = vpop.permute.xlu0 %1399
      %1401 = vrot.lane.b32.xlu0 %v1397, 17
      %v1402 = vpop.permute.xlu0 %1401
      %1403 = vrot.lane.b32.xlu0 %v1396, 17
      %v1404 = vpop.permute.xlu0 %1403
      %1405 = vrot.lane.b32.xlu0 %v1398, 17
      %v1406 = vpop.permute.xlu0 %1405
      %v1407 = vsel %vm213, %v1400, %v1404
      %v1408 = vsel %vm213, %v1402, %v1406
      %v1409 = vsel %vm213, %v1404, %v1400
      %v1410 = vsel %vm213, %v1406, %v1402
      %v1411 = vld [vmem:[%s1] sm:$0xff]
      %v1412 = vld [vmem:[%s1 + $0x8] sm:$0xff]
      %v1413 = vld [vmem:[%s1 + $0x10] sm:$0xff]
      %v1414 = vld [vmem:[%s1 + $0x18] sm:$0xff]
      %v1415 = vmul.f32 %v1409, %v1411
      %v1416 = vmul.f32 %v1407, %v1412
      %v1417 = vmul.f32 %v1410, %v1413
      %v1418 = vmul.f32 %v1408, %v1414
      %v1419 = vpack.c.bf16 %v1416, %v1415
      %v1420 = vpack.c.bf16 %v1418, %v1417
      %1421 = vst [vmem:[#allocation2] sm:$0xff] %v1419
      %1422 = vst [vmem:[#allocation2 + $0x8] sm:$0xff] %v1420
      %1423 = vrot.lane.b32.xlu0 %v1395, 16
      %v1424 = vpop.permute.xlu0 %1423
      %1425 = vrot.lane.b32.xlu0 %v1397, 16
      %v1426 = vpop.permute.xlu0 %1425
      %1427 = vrot.lane.b32.xlu0 %v1396, 16
      %v1428 = vpop.permute.xlu0 %1427
      %1429 = vrot.lane.b32.xlu0 %v1398, 16
      %v1430 = vpop.permute.xlu0 %1429
      %v1431 = vsel %vm238, %v1424, %v1428
      %v1432 = vsel %vm238, %v1426, %v1430
      %v1433 = vsel %vm238, %v1428, %v1424
      %v1434 = vsel %vm238, %v1430, %v1426
      %v1435 = vld [vmem:[%s243] sm:$0xff]
      %v1436 = vld [vmem:[%s243 + $0x8] sm:$0xff]
      %v1437 = vld [vmem:[%s243 + $0x10] sm:$0xff]
      %v1438 = vld [vmem:[%s243 + $0x18] sm:$0xff]
      %v1439 = vmul.f32 %v1433, %v1435
      %v1440 = vmul.f32 %v1431, %v1436
      %v1441 = vmul.f32 %v1434, %v1437
      %v1442 = vmul.f32 %v1432, %v1438
      %v1443 = vpack.c.bf16 %v1440, %v1439
      %v1444 = vpack.c.bf16 %v1442, %v1441
      %1445 = vst [vmem:[#allocation2 + $0x10] sm:$0xff] %v1443
      %1446 = vst [vmem:[#allocation2 + $0x18] sm:$0xff] %v1444
      %1447 = vrot.lane.b32.xlu0 %v1395, 15
      %v1448 = vpop.permute.xlu0 %1447
      %1449 = vrot.lane.b32.xlu0 %v1397, 15
      %v1450 = vpop.permute.xlu0 %1449
      %1451 = vrot.lane.b32.xlu0 %v1396, 15
      %v1452 = vpop.permute.xlu0 %1451
      %1453 = vrot.lane.b32.xlu0 %v1398, 15
      %v1454 = vpop.permute.xlu0 %1453
      %v1455 = vsel %vm264, %v1448, %v1452
      %v1456 = vsel %vm264, %v1450, %v1454
      %v1457 = vsel %vm264, %v1452, %v1448
      %v1458 = vsel %vm264, %v1454, %v1450
      %v1459 = vld [vmem:[%s269] sm:$0xff]
      %v1460 = vld [vmem:[%s269 + $0x8] sm:$0xff]
      %v1461 = vld [vmem:[%s269 + $0x10] sm:$0xff]
      %v1462 = vld [vmem:[%s269 + $0x18] sm:$0xff]
      %v1463 = vmul.f32 %v1457, %v1459
      %v1464 = vmul.f32 %v1455, %v1460
      %v1465 = vmul.f32 %v1458, %v1461
      %v1466 = vmul.f32 %v1456, %v1462
      %v1467 = vpack.c.bf16 %v1464, %v1463
      %v1468 = vpack.c.bf16 %v1466, %v1465
      %1469 = vst [vmem:[#allocation2 + $0x20] sm:$0xff] %v1467
      %1470 = vst [vmem:[#allocation2 + $0x28] sm:$0xff] %v1468
      %1471 = vrot.lane.b32.xlu0 %v1395, 1
      %v1472 = vpop.permute.xlu0 %1471
      %1473 = vrot.lane.b32.xlu0 %v1397, 1
      %v1474 = vpop.permute.xlu0 %1473
      %1475 = vrot.lane.b32.xlu0 %v1396, 1
      %v1476 = vpop.permute.xlu0 %1475
      %1477 = vrot.lane.b32.xlu0 %v1398, 1
      %v1478 = vpop.permute.xlu0 %1477
      %v1479 = vsel %vm290, %v1472, %v1476
      %v1480 = vsel %vm290, %v1474, %v1478
      %v1481 = vsel %vm290, %v1476, %v1472
      %v1482 = vsel %vm290, %v1478, %v1474
      %v1483 = vld [vmem:[%s295] sm:$0xff]
      %v1484 = vld [vmem:[%s295 + $0x8] sm:$0xff]
      %v1485 = vld [vmem:[%s295 + $0x10] sm:$0xff]
      %v1486 = vld [vmem:[%s295 + $0x18] sm:$0xff]
      %v1487 = vmul.f32 %v1481, %v1483
      %v1488 = vmul.f32 %v1479, %v1484
      %v1489 = vmul.f32 %v1482, %v1485
      %v1490 = vmul.f32 %v1480, %v1486
      %v1491 = vpack.c.bf16 %v1488, %v1487
      %v1492 = vpack.c.bf16 %v1490, %v1489
      %1493 = vst [vmem:[#allocation2 + $0x30] sm:$0xff] %v1491
      %1494 = vst [vmem:[#allocation2 + $0x38] sm:$0xff] %v1492
      %v1495 = vpack.c.bf16 %v1396, %v1395
      %v1496 = vpack.c.bf16 %v1398, %v1397
      %1497 = vst [vmem:[#allocation2 + $0x40] sm:$0xff] %v1495
      %1498 = vst [vmem:[#allocation2 + $0x48] sm:$0xff] %v1496
      %1499 = vrot.lane.b32.xlu0 %v1395, 127
      %v1500 = vpop.permute.xlu0 %1499
      %1501 = vrot.lane.b32.xlu0 %v1397, 127
      %v1502 = vpop.permute.xlu0 %1501
      %1503 = vrot.lane.b32.xlu0 %v1396, 127
      %v1504 = vpop.permute.xlu0 %1503
      %1505 = vrot.lane.b32.xlu0 %v1398, 127
      %v1506 = vpop.permute.xlu0 %1505
      %v1507 = vsel %vm320, %v1500, %v1504
      %v1508 = vsel %vm320, %v1502, %v1506
      %v1509 = vsel %vm320, %v1504, %v1500
      %v1510 = vsel %vm320, %v1506, %v1502
      %v1511 = vld [vmem:[%s325] sm:$0xff]
      %v1512 = vld [vmem:[%s325 + $0x8] sm:$0xff]
      %v1513 = vld [vmem:[%s325 + $0x10] sm:$0xff]
      %v1514 = vld [vmem:[%s325 + $0x18] sm:$0xff]
      %v1515 = vmul.f32 %v1507, %v1511
      %v1516 = vmul.f32 %v1509, %v1512
      %v1517 = vmul.f32 %v1508, %v1513
      %v1518 = vmul.f32 %v1510, %v1514
      %v1519 = vpack.c.bf16 %v1516, %v1515
      %v1520 = vpack.c.bf16 %v1518, %v1517
      %1521 = vst [vmem:[#allocation2 + $0x50] sm:$0xff] %v1519
      %1522 = vst [vmem:[#allocation2 + $0x58] sm:$0xff] %v1520
      %1523 = vrot.lane.b32.xlu0 %v1395, 113
      %v1524 = vpop.permute.xlu0 %1523
      %1525 = vrot.lane.b32.xlu0 %v1397, 113
      %v1526 = vpop.permute.xlu0 %1525
      %1527 = vrot.lane.b32.xlu0 %v1396, 113
      %v1528 = vpop.permute.xlu0 %1527
      %1529 = vrot.lane.b32.xlu0 %v1398, 113
      %v1530 = vpop.permute.xlu0 %1529
      %v1531 = vsel %vm346, %v1524, %v1528
      %v1532 = vsel %vm346, %v1526, %v1530
      %v1533 = vsel %vm346, %v1528, %v1524
      %v1534 = vsel %vm346, %v1530, %v1526
      %v1535 = vld [vmem:[%s351] sm:$0xff]
      %v1536 = vld [vmem:[%s351 + $0x8] sm:$0xff]
      %v1537 = vld [vmem:[%s351 + $0x10] sm:$0xff]
      %v1538 = vld [vmem:[%s351 + $0x18] sm:$0xff]
      %v1539 = vmul.f32 %v1531, %v1535
      %v1540 = vmul.f32 %v1533, %v1536
      %v1541 = vmul.f32 %v1532, %v1537
      %v1542 = vmul.f32 %v1534, %v1538
      %v1543 = vpack.c.bf16 %v1540, %v1539
      %v1544 = vpack.c.bf16 %v1542, %v1541
      %1545 = vst [vmem:[#allocation2 + $0x60] sm:$0xff] %v1543
      %1546 = vst [vmem:[#allocation2 + $0x68] sm:$0xff] %v1544
      %1547 = vrot.lane.b32.xlu0 %v1395, 112
      %v1548 = vpop.permute.xlu0 %1547
      %1549 = vrot.lane.b32.xlu0 %v1397, 112
      %v1550 = vpop.permute.xlu0 %1549
      %1551 = vrot.lane.b32.xlu0 %v1396, 112
      %v1552 = vpop.permute.xlu0 %1551
      %1553 = vrot.lane.b32.xlu0 %v1398, 112
      %v1554 = vpop.permute.xlu0 %1553
      %v1555 = vsel %vm372, %v1548, %v1552
      %v1556 = vsel %vm372, %v1550, %v1554
      %v1557 = vsel %vm372, %v1552, %v1548
      %v1558 = vsel %vm372, %v1554, %v1550
      %v1559 = vld [vmem:[%s377] sm:$0xff]
      %v1560 = vld [vmem:[%s377 + $0x8] sm:$0xff]
      %v1561 = vld [vmem:[%s377 + $0x10] sm:$0xff]
      %v1562 = vld [vmem:[%s377 + $0x18] sm:$0xff]
      %v1563 = vmul.f32 %v1555, %v1559
      %v1564 = vmul.f32 %v1557, %v1560
      %v1565 = vmul.f32 %v1556, %v1561
      %v1566 = vmul.f32 %v1558, %v1562
      %v1567 = vpack.c.bf16 %v1564, %v1563
      %v1568 = vpack.c.bf16 %v1566, %v1565
      %1569 = vst [vmem:[#allocation2 + $0x70] sm:$0xff] %v1567
      %1570 = vst [vmem:[#allocation2 + $0x78] sm:$0xff] %v1568
      %1571 = vrot.lane.b32.xlu0 %v1395, 111
      %v1572 = vpop.permute.xlu0 %1571
      %1573 = vrot.lane.b32.xlu0 %v1397, 111
      %v1574 = vpop.permute.xlu0 %1573
      %1575 = vrot.lane.b32.xlu0 %v1396, 111
      %v1576 = vpop.permute.xlu0 %1575
      %1577 = vrot.lane.b32.xlu0 %v1398, 111
      %v1578 = vpop.permute.xlu0 %1577
      %v1579 = vsel %vm398, %v1572, %v1576
      %v1580 = vsel %vm398, %v1574, %v1578
      %v1581 = vsel %vm398, %v1576, %v1572
      %v1582 = vsel %vm398, %v1578, %v1574
      %v1583 = vld [vmem:[%s403] sm:$0xff]
      %v1584 = vld [vmem:[%s403 + $0x8] sm:$0xff]
      %v1585 = vld [vmem:[%s403 + $0x10] sm:$0xff]
      %v1586 = vld [vmem:[%s403 + $0x18] sm:$0xff]
      %v1587 = vmul.f32 %v1579, %v1583
      %v1588 = vmul.f32 %v1581, %v1584
      %v1589 = vmul.f32 %v1580, %v1585
      %v1590 = vmul.f32 %v1582, %v1586
      %v1591 = vpack.c.bf16 %v1588, %v1587
      %v1592 = vpack.c.bf16 %v1590, %v1589
      %1593 = vst [vmem:[#allocation2 + $0x80] sm:$0xff] %v1591
      %1594 = vst [vmem:[#allocation2 + $0x88] sm:$0xff] %v1592
      %s1595 = scalar_lea.vmem %s2, 48
      %v1596 = vld [vmem:[%s1595] sm:$0xff]
      %v1597 = vld [vmem:[%s1595 + $0x8] sm:$0xff]
      %v1598 = vld [vmem:[#allocation2] sm:$0xff]
      %v1599 = vld [vmem:[#allocation2 + $0x8] sm:$0xff]
      %v1600 = vld [vmem:[#allocation2 + $0x10] sm:$0xff]
      %v1601 = vld [vmem:[#allocation2 + $0x18] sm:$0xff]
      %v1602 = vld [vmem:[#allocation2 + $0x20] sm:$0xff]
      %v1603 = vld [vmem:[#allocation2 + $0x28] sm:$0xff]
      %v1604 = vld [vmem:[#allocation2 + $0x30] sm:$0xff]
      %v1605 = vld [vmem:[#allocation2 + $0x38] sm:$0xff]
      %v1606 = vld [vmem:[#allocation2 + $0x40] sm:$0xff]
      %v1607 = vld [vmem:[#allocation2 + $0x48] sm:$0xff]
      %v1608 = vld [vmem:[#allocation2 + $0x50] sm:$0xff]
      %v1609 = vld [vmem:[#allocation2 + $0x58] sm:$0xff]
      %v1610 = vld [vmem:[#allocation2 + $0x60] sm:$0xff]
      %v1611 = vld [vmem:[#allocation2 + $0x68] sm:$0xff]
      %v1612 = vld [vmem:[#allocation2 + $0x70] sm:$0xff]
      %v1613 = vld [vmem:[#allocation2 + $0x78] sm:$0xff]
      %v1614 = vld [vmem:[#allocation2 + $0x80] sm:$0xff]
      %v1615 = vld [vmem:[#allocation2 + $0x88] sm:$0xff]
      %s1616 = scalar_lea.vmem %s3, 48
      %v1617 = vld [vmem:[%s1616] sm:$0xff]
      %v1618 = vld [vmem:[%s1616 + $0x8] sm:$0xff]
      %1620 = vset.pattern.permute.xlu0 0
      %1621 = vperm.xlu0 %1620, %v1617
      %v1622 = vpop.permute.xlu0 %1621
      %1625 = vset.pattern.permute.xlu0 0
      %1626 = vperm.xlu0 %1625, %v1618
      %v1627 = vpop.permute.xlu0 %1626
      %v1631 = vunpack.c.l.b16 %v1596
      %v1632 = vunpack.c.h.b16 %v1596
      %v1633 = vunpack.c.l.b16 %v1597
      %v1634 = vunpack.c.h.b16 %v1597
      %v1635 = vpack.c.b16 %v1633, %v1631
      %v1636 = vpack.c.b16 %v1634, %v1632
      %v1656 = vunpack.c.l.b16 %v1598
      %v1657 = vunpack.c.h.b16 %v1598
      %v1658 = vunpack.c.l.b16 %v1599
      %v1659 = vunpack.c.h.b16 %v1599
      %v1660 = vunpack.c.l.b16 %v1600
      %v1661 = vunpack.c.h.b16 %v1600
      %v1662 = vunpack.c.l.b16 %v1601
      %v1663 = vunpack.c.h.b16 %v1601
      %v1664 = vunpack.c.l.b16 %v1602
      %v1665 = vunpack.c.h.b16 %v1602
      %v1666 = vunpack.c.l.b16 %v1603
      %v1667 = vunpack.c.h.b16 %v1603
      %v1668 = vunpack.c.l.b16 %v1604
      %v1669 = vunpack.c.h.b16 %v1604
      %v1670 = vunpack.c.l.b16 %v1605
      %v1671 = vunpack.c.h.b16 %v1605
      %v1672 = vunpack.c.l.b16 %v1606
      %v1673 = vunpack.c.h.b16 %v1606
      %v1674 = vunpack.c.l.b16 %v1607
      %v1675 = vunpack.c.h.b16 %v1607
      %v1676 = vunpack.c.l.b16 %v1608
      %v1677 = vunpack.c.h.b16 %v1608
      %v1678 = vunpack.c.l.b16 %v1609
      %v1679 = vunpack.c.h.b16 %v1609
      %v1680 = vunpack.c.l.b16 %v1610
      %v1681 = vunpack.c.h.b16 %v1610
      %v1682 = vunpack.c.l.b16 %v1611
      %v1683 = vunpack.c.h.b16 %v1611
      %v1684 = vunpack.c.l.b16 %v1612
      %v1685 = vunpack.c.h.b16 %v1612
      %v1686 = vunpack.c.l.b16 %v1613
      %v1687 = vunpack.c.h.b16 %v1613
      %v1688 = vunpack.c.l.b16 %v1614
      %v1689 = vunpack.c.h.b16 %v1614
      %v1690 = vunpack.c.l.b16 %v1615
      %v1691 = vunpack.c.h.b16 %v1615
      %v1692 = vpack.c.b16 %v1658, %v1656
      %v1693 = vpack.c.b16 %v1659, %v1657
      %v1694 = vpack.c.b16 %v1662, %v1660
      %v1695 = vpack.c.b16 %v1663, %v1661
      %v1696 = vpack.c.b16 %v1666, %v1664
      %v1697 = vpack.c.b16 %v1667, %v1665
      %v1698 = vpack.c.b16 %v1670, %v1668
      %v1699 = vpack.c.b16 %v1671, %v1669
      %v1700 = vpack.c.b16 %v1674, %v1672
      %v1701 = vpack.c.b16 %v1675, %v1673
      %v1702 = vpack.c.b16 %v1678, %v1676
      %v1703 = vpack.c.b16 %v1679, %v1677
      %v1704 = vpack.c.b16 %v1682, %v1680
      %v1705 = vpack.c.b16 %v1683, %v1681
      %v1706 = vpack.c.b16 %v1686, %v1684
      %v1707 = vpack.c.b16 %v1687, %v1685
      %v1708 = vpack.c.b16 %v1690, %v1688
      %v1709 = vpack.c.b16 %v1691, %v1689
      %v1729 = vsel %vm547, %v1636, 0
      %1731 = vmatpush.bf16.msra.mxu0 %v1706
      %1732 = vmatpush.bf16.msra.mxu0 %v1704
      %1733 = vmatpush.bf16.msra.mxu0 %v1702
      %1734 = vmatpush.bf16.msra.mxu0 %v1700
      %1735 = vmatpush.bf16.msra.mxu0 %v1698
      %1736 = vmatpush.bf16.msra.mxu0 %v1696
      %1737 = vmatpush.bf16.msra.mxu0 %v1694
      %1738 = vmatpush.bf16.msra.mxu0 %v1692
      %1739 = vmatmul.bf16.gmra.mxu0 %v1635
      %v1740 = vpop.f32.mrf.mxu0
      %v1741 = vadd.f32 %v1622, %v1740
      %v1742 = vpop.f32.mrf.mxu0
      %v1743 = vadd.f32 %v1627, %v1742
      %1744 = vdwg.mxu0
      %1745 = vmatpush.bf16.msra.mxu0 0
      %1746 = vmatpush.bf16.msra.mxu0 0
      %1747 = vmatpush.bf16.msra.mxu0 0
      %1748 = vmatpush.bf16.msra.mxu0 0
      %1749 = vmatpush.bf16.msra.mxu0 0
      %1750 = vmatpush.bf16.msra.mxu0 0
      %1751 = vmatpush.bf16.msra.mxu0 0
      %1752 = vmatpush.bf16.msra.mxu0 %v1708
      %1753 = vmatmul.bf16.gmra.mxu0 %v1729
      %v1754 = vpop.f32.mrf.mxu0
      %v1755 = vadd.f32 %v1741, %v1754
      %v1756 = vpop.f32.mrf.mxu0
      %v1757 = vadd.f32 %v1743, %v1756
      %1758 = vdwg.mxu0
      %1759 = vmatpush.bf16.msra.mxu0 %v1707
      %1760 = vmatpush.bf16.msra.mxu0 %v1705
      %1761 = vmatpush.bf16.msra.mxu0 %v1703
      %1762 = vmatpush.bf16.msra.mxu0 %v1701
      %1763 = vmatpush.bf16.msra.mxu0 %v1699
      %1764 = vmatpush.bf16.msra.mxu0 %v1697
      %1765 = vmatpush.bf16.msra.mxu0 %v1695
      %1766 = vmatpush.bf16.msra.mxu0 %v1693
      %1767 = vmatmul.bf16.gmra.mxu0 %v1635
      %v1768 = vpop.f32.mrf.mxu0
      %v1769 = vadd.f32 %v1622, %v1768
      %v1770 = vpop.f32.mrf.mxu0
      %v1771 = vadd.f32 %v1627, %v1770
      %1772 = vdwg.mxu0
      %1773 = vmatpush.bf16.msra.mxu0 0
      %1774 = vmatpush.bf16.msra.mxu0 0
      %1775 = vmatpush.bf16.msra.mxu0 0
      %1776 = vmatpush.bf16.msra.mxu0 0
      %1777 = vmatpush.bf16.msra.mxu0 0
      %1778 = vmatpush.bf16.msra.mxu0 0
      %1779 = vmatpush.bf16.msra.mxu0 0
      %1780 = vmatpush.bf16.msra.mxu0 %v1709
      %1781 = vmatmul.bf16.gmra.mxu0 %v1729
      %v1782 = vpop.f32.mrf.mxu0
      %v1783 = vadd.f32 %v1769, %v1782
      %v1784 = vpop.f32.mrf.mxu0
      %v1785 = vadd.f32 %v1771, %v1784
      %1786 = vdwg.mxu0
      %v1787 = vadd.f32 %v1755, %v1003
      %v1788 = vadd.f32 %v1783, %v1004
      %v1789 = vadd.f32 %v1757, %v1005
      %v1790 = vadd.f32 %v1785, %v1006
      %v1791 = vmax.f32 %v1787, 0.0
      %v1792 = vmax.f32 %v1788, 0.0
      %v1793 = vmax.f32 %v1789, 0.0
      %v1794 = vmax.f32 %v1790, 0.0
      %1795 = vst [vmem:[%s197] sm:$0xff] %v1791
      %1796 = vst [vmem:[%s197 + $0x8] sm:$0xff] %v1792
      %1797 = vst [vmem:[%s197 + $0x10] sm:$0xff] %v1793
      %1798 = vst [vmem:[%s197 + $0x18] sm:$0xff] %v1794
      %p1799 = scmp.lt.s32.totalorder %s15, 1
      %s1800 = scalar_select %p1799, %s15, 1
      %s1801 = smul.addr %s1800, 4
      %s1802 = smul.addr %s1801, 8
      %s1803 = scalar_lea.vmem %s4, %s1802
      // Predicated region
      $region37: #{_lambda_.1} parent=35 // pred_check
        %p1804 = pneg %p122
      $region38: #{_lambda_.1} parent=35 // pred_check_branch
        %1806 = sbr.rel (%p1804) target = $region40
      $region39: #{_lambda_.1} parent=35 // pred_region
        _
      $region40: #{_lambda_.1} parent=35 // pred_fallthru
        _
    $region36: #{_lambda_.1} parent=5 // pred_fallthru
      _
    %p1807 = scmp.le.s32.totalorder 2, %s10
    // Predicated region
    $region41: #{_lambda_.1} parent=5 // pred_check
      %p1808 = pneg %p1807
    $region42: #{_lambda_.1} parent=5 // pred_check_branch
      %1810 = sbr.rel (%p1808) target = $region44
    $region43: #{_lambda_.1} parent=5 // pred_region
      %s1811 = ssub.s32 %s10, 2
      // Predicated region
      $region45: #{_lambda_.1} parent=43 // pred_check
        %p1812 = pneg %p128
      $region46: #{_lambda_.1} parent=43 // pred_check_branch
        %1814 = sbr.rel (%p1812) target = $region48
      $region47: #{_lambda_.1} parent=43 // pred_region
        %p1815 = scmp.lt.s32.totalorder %s16, 1
        %s1816 = scalar_select %p1815, %s16, 1
        %s1817 = smul.addr %s1816, 4
        %s1818 = smul.addr %s1817, 8
        %s1819 = scalar_lea.vmem %s4, %s1818
      $region48: #{_lambda_.1} parent=43 // pred_fallthru
        _
    $region44: #{_lambda_.1} parent=5 // pred_fallthru
      _
  $region6: #{_lambda_.1} parent=0 // loop_footer
    %s14 = sadd.s32 1, %s10
  $region7: #{_lambda_.1} parent=0 // loop_footer_branch
    %9 = sbr.rel target = $region3
  $region8: #{_lambda_.1} parent=0 // loop_exit
    _

</llo_original>
